<compile_context>
chip_gen: v5e
topology: v5e:2x2
jax: 0.10.0
libtpu: 0.0.40
codegen_flags: <defaults>
</compile_context>

<pallas_src>
import jax
import jax.numpy as jnp
from jax.experimental import pallas as pl
from jax.experimental.pallas import tpu as pltpu

DIMS = [403, 350, 300, 250, 200, 150, 100, 75, 50, 25, 1]
NUM_LAYERS = 10          # linear layers
NUM_BN = 9               # BatchNorm1d(1) follows the first 9 linears
EPS = 1e-5
TB_MAX = 1024            # batch tile (rows); ~6 MiB live VMEM, fits all generations


def _round_up(n, m):
    return ((n + m - 1) // m) * m


PAD_IN = [_round_up(d, 128) for d in DIMS[:-1]]    # per-layer padded in-dim
PAD_OUT = [_round_up(d, 128) for d in DIMS[1:]]    # per-layer padded out-dim


def _detect_chip():
    """Generation-aware knobs (trace-time, Python-level)."""
    try:
        kind = jax.devices()[0].device_kind.lower()
    except Exception:
        kind = ""
    # bf16 VALU exists on v6e/v7x; keep f32 activation math on v5 and older.
    bf16_act = not any(g in kind for g in ("v2", "v3", "v4", "v5"))
    # v7x has 2 TensorCores per chip: force >=2 batch tiles so "parallel" shards.
    min_tiles = 2 if "v7" in kind else 1
    return bf16_act, min_tiles


USE_BF16_ACT, _MIN_TILES = _detect_chip()


def pd_kernel(x_ref, *refs):
    """Fused MLP on one batch tile: 9 MXU matmuls (bf16 in, f32 acc) + activations,
    final 25->1 layer + sigmoid on the VPU/XLU/EUP."""
    w_refs = refs[:NUM_LAYERS]
    b_refs = refs[NUM_LAYERS:2 * NUM_LAYERS]
    out_ref = refs[2 * NUM_LAYERS]

    h = x_ref[...]                                         # (TB, 512) bf16
    for i in range(NUM_BN):
        z = jnp.dot(h, w_refs[i][...], preferred_element_type=jnp.float32)
        z = z + b_refs[i][...]                             # BN(eval) folded into W/b, f32 add
        if USE_BF16_ACT:
            a = z.astype(jnp.bfloat16)                     # activation in bf16 (v6e/v7x VALU)
            h = jnp.maximum(a, 0.0) if i < 6 else jnp.clip(a, 0.0, 6.0)
        else:
            z = jnp.maximum(z, 0.0) if i < 6 else jnp.clip(z, 0.0, 6.0)
            h = z.astype(jnp.bfloat16)
        # Dropout is identity in eval mode.

    # Final Linear(25->1): only 25/16384 padded weight elements are useful, so do it
    # on the VPU/XLU: broadcast row-multiply + lane reduction (no MXU push/drain).
    w9 = w_refs[-1][...]                                    # (1, 128) f32, zeros past 25
    z = jnp.sum(h.astype(jnp.float32) * w9, axis=-1, keepdims=True)   # (TB, 1)
    z = z + b_refs[-1][...]                                 # (1, 1) scalar bias
    out_ref[...] = jax.nn.sigmoid(z)                        # (TB, 1) f32


def prepare_params(Ws, Bs, gamma, beta, running_mean, running_var):
    """One-time prep: fold eval-mode BN into W/b, zero-pad to MXU tiles, cast W to bf16.
    The last (25->1) layer is stored as a lane row + scalar bias for the VPU path."""
    scale = gamma / jnp.sqrt(running_var + EPS)            # (9,)
    shift = beta - running_mean * scale
    Wp, Bp = [], []
    for i in range(NUM_BN):
        W = Ws[i] * scale[i]
        b = Bs[i] * scale[i] + shift[i]
        Wpad = jnp.zeros((PAD_IN[i], PAD_OUT[i]), jnp.float32)
        Wpad = Wpad.at[:DIMS[i], :DIMS[i + 1]].set(W)
        bpad = jnp.zeros((1, PAD_OUT[i]), jnp.float32).at[0, :DIMS[i + 1]].set(b)
        Wp.append(Wpad.astype(jnp.bfloat16))               # bf16 weights (MXU-native)
        Bp.append(bpad)                                    # f32 bias, added post-matmul
    # Layer 9 (25 -> 1), no BN: keep f32 (25 useful elements, negligible cost).
    w9 = jnp.zeros((1, PAD_IN[NUM_LAYERS - 1]), jnp.float32)
    w9 = w9.at[0, :DIMS[-2]].set(Ws[-1][:, 0])
    b9 = Bs[-1].reshape(1, 1).astype(jnp.float32)
    Wp.append(w9)
    Bp.append(b9)
    return tuple(Wp), tuple(Bp)


@jax.jit
def pd_forward(x, Wp, Bp):
    """x: (N, 1, 403) float -> (N, 1, 1) float32. Eval-mode forward."""
    N = x.shape[0]

    # Generation-aware tiling: no >1-tile tail waste; >=2 tiles on v7x megacore.
    grid_n = max(-(-N // TB_MAX), _MIN_TILES if N > 16 else 1)
    TB = _round_up(-(-N // grid_n), 16)
    Bpad = TB * grid_n

    # Single fused pad+cast (one HBM write): (N,1,403) f32 -> (Bpad, 512) bf16.
    xpad = jnp.pad(x.reshape(N, DIMS[0]).astype(jnp.bfloat16),
                   ((0, Bpad - N), (0, PAD_IN[0] - DIMS[0])))

    x_spec = pl.BlockSpec((TB, PAD_IN[0]), lambda i: (i, 0))
    # Weights/biases: constant index_maps -> fetched once, VMEM-resident across the grid.
    w_specs = [pl.BlockSpec((PAD_IN[l], PAD_OUT[l]), lambda i: (0, 0))
               for l in range(NUM_BN)]
    w_specs.append(pl.BlockSpec((1, PAD_IN[NUM_LAYERS - 1]), lambda i: (0, 0)))
    b_specs = [pl.BlockSpec((1, PAD_OUT[l]), lambda i: (0, 0))
               for l in range(NUM_BN)]
    b_specs.append(pl.BlockSpec((1, 1), lambda i: (0, 0)))
    out_spec = pl.BlockSpec((TB, 1), lambda i: (i, 0))     # lane-1 output: minimal writeback

    # Advisory cost for XLA's scheduler around the custom call.
    flops = 2 * Bpad * (sum(PAD_IN[i] * PAD_OUT[i] for i in range(NUM_BN))
                        + PAD_IN[NUM_LAYERS - 1])
    bytes_accessed = (Bpad * PAD_IN[0] * 2
                      + sum(int(w.size) * w.dtype.itemsize for w in Wp)
                      + sum(int(b.size) * 4 for b in Bp)
                      + Bpad * 4)
    cost = pl.CostEstimate(flops=flops, transcendentals=Bpad,
                           bytes_accessed=bytes_accessed)

    out = pl.pallas_call(
        pd_kernel,
        out_shape=jax.ShapeDtypeStruct((Bpad, 1), jnp.float32),
        grid=(grid_n,),
        in_specs=[x_spec] + w_specs + b_specs,
        out_specs=out_spec,
        compiler_params=pltpu.CompilerParams(
            dimension_semantics=("parallel",),             # megacore sharding on v7x
        ),
        cost_estimate=cost,
    )(xpad, *Wp, *Bp)

    return out[:N].reshape(N, 1, 1)


def make_params(key):
    """PyTorch-style init for the 10 Linear layers + non-trivial BN(1) eval stats."""
    keys = jax.random.split(key, 2 * NUM_LAYERS + 4)
    Ws, Bs = [], []
    for i in range(NUM_LAYERS):
        fan_in = DIMS[i]
        bound = 1.0 / (fan_in ** 0.5)
        # Stored as (in, out) so the kernel computes x @ W (== x @ W_pt.T).
        W = jax.random.uniform(keys[2 * i], (DIMS[i], DIMS[i + 1]),
                               jnp.float32, -bound, bound)
        b = jax.random.uniform(keys[2 * i + 1], (DIMS[i + 1],),
                               jnp.float32, -bound, bound)
        Ws.append(W)
        Bs.append(b)
    k0, k1, k2, k3 = keys[-4:]
    gamma = 1.0 + 0.1 * jax.random.normal(k0, (NUM_BN,), jnp.float32)
    beta = 0.1 * jax.random.normal(k1, (NUM_BN,), jnp.float32)
    running_mean = 0.1 * jax.random.normal(k2, (NUM_BN,), jnp.float32)
    running_var = 1.0 + 0.2 * jax.random.uniform(k3, (NUM_BN,), jnp.float32)
    return Ws, Bs, gamma, beta, running_mean, running_var


def pd_reference(x, Ws, Bs, gamma, beta, running_mean, running_var):
    """Pure-JAX f32 reference matching the PyTorch eval-mode forward."""
    N = x.shape[0]
    h = x.reshape(N, DIMS[0]).astype(jnp.float32)
    scale = gamma / jnp.sqrt(running_var + EPS)
    shift = beta - running_mean * scale
    for i in range(NUM_BN):
        z = h @ Ws[i] + Bs[i]
        z = z * scale[i] + shift[i]
        h = jnp.maximum(z, 0.0) if i < 6 else jnp.clip(z, 0.0, 6.0)
    z = h @ Ws[-1] + Bs[-1]
    return jax.nn.sigmoid(z).reshape(N, 1, 1)


if __name__ == "__main__":
    key = jax.random.PRNGKey(0)
    pkey, xkey = jax.random.split(key)

    Ws, Bs, gamma, beta, rm, rv = make_params(pkey)
    Wp, Bp = prepare_params(Ws, Bs, gamma, beta, rm, rv)   # one-time, outside forward

    # Input implied by BatchNorm1d(num_features=1) after Linear: (N, 1, 403).
    x = jax.random.normal(xkey, (4, 1, 403), dtype=jnp.float32)

    out = pd_forward(x, Wp, Bp)
    out = jax.block_until_ready(out)

    ref = pd_reference(x, Ws, Bs, gamma, beta, rm, rv)
    assert out.shape == (4, 1, 1), out.shape
    # bf16 matmuls (f32 accumulation) vs f32 reference -> loosened tolerance.
    assert jnp.allclose(out, ref, atol=2e-2, rtol=0.0), (out, ref)

    print("KERNEL_OK")
</pallas_src>

<mosaic_0001>
module attributes {stable_mosaic.version = 11 : i64} {
  func.func @pd_kernel(%arg0: i32, %arg1: memref<16x512xbf16, #tpu.memory_space<vmem>>, %arg2: memref<512x384xbf16, #tpu.memory_space<vmem>>, %arg3: memref<384x384xbf16, #tpu.memory_space<vmem>>, %arg4: memref<384x256xbf16, #tpu.memory_space<vmem>>, %arg5: memref<256x256xbf16, #tpu.memory_space<vmem>>, %arg6: memref<256x256xbf16, #tpu.memory_space<vmem>>, %arg7: memref<256x128xbf16, #tpu.memory_space<vmem>>, %arg8: memref<128x128xbf16, #tpu.memory_space<vmem>>, %arg9: memref<128x128xbf16, #tpu.memory_space<vmem>>, %arg10: memref<128x128xbf16, #tpu.memory_space<vmem>>, %arg11: memref<1x128xf32, #tpu.memory_space<vmem>>, %arg12: memref<1x384xf32, #tpu.memory_space<vmem>>, %arg13: memref<1x384xf32, #tpu.memory_space<vmem>>, %arg14: memref<1x256xf32, #tpu.memory_space<vmem>>, %arg15: memref<1x256xf32, #tpu.memory_space<vmem>>, %arg16: memref<1x256xf32, #tpu.memory_space<vmem>>, %arg17: memref<1x128xf32, #tpu.memory_space<vmem>>, %arg18: memref<1x128xf32, #tpu.memory_space<vmem>>, %arg19: memref<1x128xf32, #tpu.memory_space<vmem>>, %arg20: memref<1x128xf32, #tpu.memory_space<vmem>>, %arg21: memref<1x1xf32, #tpu.memory_space<vmem>>, %arg22: memref<16x1xf32, #tpu.memory_space<vmem>>) attributes {dimension_semantics = [#tpu.dimension_semantics<parallel>], iteration_bounds = array<i64: 1>, scalar_prefetch = 0 : i64, scratch_operands = 0 : i64, tpu.core_type = #tpu.core_type<tc>, window_params = [{transform_indices = @transform_0, window_bounds = array<i64: 16, 512>}, {pipeline_mode = #tpu.pipeline_mode<synchronous>, transform_indices = @transform_1, window_bounds = array<i64: 512, 384>}, {pipeline_mode = #tpu.pipeline_mode<synchronous>, transform_indices = @transform_2, window_bounds = array<i64: 384, 384>}, {pipeline_mode = #tpu.pipeline_mode<synchronous>, transform_indices = @transform_3, window_bounds = array<i64: 384, 256>}, {pipeline_mode = #tpu.pipeline_mode<synchronous>, transform_indices = @transform_4, window_bounds = array<i64: 256, 256>}, {pipeline_mode = #tpu.pipeline_mode<synchronous>, transform_indices = @transform_5, window_bounds = array<i64: 256, 256>}, {pipeline_mode = #tpu.pipeline_mode<synchronous>, transform_indices = @transform_6, window_bounds = array<i64: 256, 128>}, {pipeline_mode = #tpu.pipeline_mode<synchronous>, transform_indices = @transform_7, window_bounds = array<i64: 128, 128>}, {pipeline_mode = #tpu.pipeline_mode<synchronous>, transform_indices = @transform_8, window_bounds = array<i64: 128, 128>}, {pipeline_mode = #tpu.pipeline_mode<synchronous>, transform_indices = @transform_9, window_bounds = array<i64: 128, 128>}, {pipeline_mode = #tpu.pipeline_mode<synchronous>, transform_indices = @transform_10, window_bounds = array<i64: 1, 128>}, {pipeline_mode = #tpu.pipeline_mode<synchronous>, transform_indices = @transform_11, window_bounds = array<i64: 1, 384>}, {pipeline_mode = #tpu.pipeline_mode<synchronous>, transform_indices = @transform_12, window_bounds = array<i64: 1, 384>}, {pipeline_mode = #tpu.pipeline_mode<synchronous>, transform_indices = @transform_13, window_bounds = array<i64: 1, 256>}, {pipeline_mode = #tpu.pipeline_mode<synchronous>, transform_indices = @transform_14, window_bounds = array<i64: 1, 256>}, {pipeline_mode = #tpu.pipeline_mode<synchronous>, transform_indices = @transform_15, window_bounds = array<i64: 1, 256>}, {pipeline_mode = #tpu.pipeline_mode<synchronous>, transform_indices = @transform_16, window_bounds = array<i64: 1, 128>}, {pipeline_mode = #tpu.pipeline_mode<synchronous>, transform_indices = @transform_17, window_bounds = array<i64: 1, 128>}, {pipeline_mode = #tpu.pipeline_mode<synchronous>, transform_indices = @transform_18, window_bounds = array<i64: 1, 128>}, {pipeline_mode = #tpu.pipeline_mode<synchronous>, transform_indices = @transform_19, window_bounds = array<i64: 1, 128>}, {pipeline_mode = #tpu.pipeline_mode<synchronous>, transform_indices = @transform_20, window_bounds = array<i64: 1, 1>}, {transform_indices = @transform_21, window_bounds = array<i64: 16, 1>}]} {
    %c0 = arith.constant 0 : index
    %c0_0 = arith.constant 0 : index
    %0 = vector.load %arg1[%c0, %c0_0] : memref<16x512xbf16, #tpu.memory_space<vmem>>, vector<16x512xbf16>
    %c0_1 = arith.constant 0 : index
    %c0_2 = arith.constant 0 : index
    %1 = vector.load %arg2[%c0_1, %c0_2] : memref<512x384xbf16, #tpu.memory_space<vmem>>, vector<512x384xbf16>
    %cst = arith.constant dense<0.000000e+00> : vector<16x384xf32>
    %2 = tpu.matmul %0, %1, %cst {dimension_numbers = #tpu.dot_dimension_numbers<[1], [0], [0], [1], [0, 0, 1, 1], [], []>} : vector<16x512xbf16>, vector<512x384xbf16>, vector<16x384xf32> -> vector<16x384xf32>
    %c0_3 = arith.constant 0 : index
    %c0_4 = arith.constant 0 : index
    %3 = vector.load %arg12[%c0_3, %c0_4] : memref<1x384xf32, #tpu.memory_space<vmem>>, vector<1x384xf32>
    %4 = vector.broadcast %3 : vector<1x384xf32> to vector<16x384xf32>
    %5 = arith.addf %2, %4 : vector<16x384xf32>
    %6 = arith.truncf %5 : vector<16x384xf32> to vector<16x384xbf16>
    %cst_5 = arith.constant 0.000000e+00 : bf16
    %7 = vector.broadcast %cst_5 : bf16 to vector<16x384xbf16>
    %8 = arith.maximumf %6, %7 : vector<16x384xbf16>
    %c0_6 = arith.constant 0 : index
    %c0_7 = arith.constant 0 : index
    %9 = vector.load %arg3[%c0_6, %c0_7] : memref<384x384xbf16, #tpu.memory_space<vmem>>, vector<384x384xbf16>
    %cst_8 = arith.constant dense<0.000000e+00> : vector<16x384xf32>
    %10 = tpu.matmul %8, %9, %cst_8 {dimension_numbers = #tpu.dot_dimension_numbers<[1], [0], [0], [1], [0, 0, 1, 1], [], []>} : vector<16x384xbf16>, vector<384x384xbf16>, vector<16x384xf32> -> vector<16x384xf32>
    %c0_9 = arith.constant 0 : index
    %c0_10 = arith.constant 0 : index
    %11 = vector.load %arg13[%c0_9, %c0_10] : memref<1x384xf32, #tpu.memory_space<vmem>>, vector<1x384xf32>
    %12 = vector.broadcast %11 : vector<1x384xf32> to vector<16x384xf32>
    %13 = arith.addf %10, %12 : vector<16x384xf32>
    %14 = arith.truncf %13 : vector<16x384xf32> to vector<16x384xbf16>
    %cst_11 = arith.constant 0.000000e+00 : bf16
    %15 = vector.broadcast %cst_11 : bf16 to vector<16x384xbf16>
    %16 = arith.maximumf %14, %15 : vector<16x384xbf16>
    %c0_12 = arith.constant 0 : index
    %c0_13 = arith.constant 0 : index
    %17 = vector.load %arg4[%c0_12, %c0_13] : memref<384x256xbf16, #tpu.memory_space<vmem>>, vector<384x256xbf16>
    %cst_14 = arith.constant dense<0.000000e+00> : vector<16x256xf32>
    %18 = tpu.matmul %16, %17, %cst_14 {dimension_numbers = #tpu.dot_dimension_numbers<[1], [0], [0], [1], [0, 0, 1, 1], [], []>} : vector<16x384xbf16>, vector<384x256xbf16>, vector<16x256xf32> -> vector<16x256xf32>
    %c0_15 = arith.constant 0 : index
    %c0_16 = arith.constant 0 : index
    %19 = vector.load %arg14[%c0_15, %c0_16] : memref<1x256xf32, #tpu.memory_space<vmem>>, vector<1x256xf32>
    %20 = vector.broadcast %19 : vector<1x256xf32> to vector<16x256xf32>
    %21 = arith.addf %18, %20 : vector<16x256xf32>
    %22 = arith.truncf %21 : vector<16x256xf32> to vector<16x256xbf16>
    %cst_17 = arith.constant 0.000000e+00 : bf16
    %23 = vector.broadcast %cst_17 : bf16 to vector<16x256xbf16>
    %24 = arith.maximumf %22, %23 : vector<16x256xbf16>
    %c0_18 = arith.constant 0 : index
    %c0_19 = arith.constant 0 : index
    %25 = vector.load %arg5[%c0_18, %c0_19] : memref<256x256xbf16, #tpu.memory_space<vmem>>, vector<256x256xbf16>
    %cst_20 = arith.constant dense<0.000000e+00> : vector<16x256xf32>
    %26 = tpu.matmul %24, %25, %cst_20 {dimension_numbers = #tpu.dot_dimension_numbers<[1], [0], [0], [1], [0, 0, 1, 1], [], []>} : vector<16x256xbf16>, vector<256x256xbf16>, vector<16x256xf32> -> vector<16x256xf32>
    %c0_21 = arith.constant 0 : index
    %c0_22 = arith.constant 0 : index
    %27 = vector.load %arg15[%c0_21, %c0_22] : memref<1x256xf32, #tpu.memory_space<vmem>>, vector<1x256xf32>
    %28 = vector.broadcast %27 : vector<1x256xf32> to vector<16x256xf32>
    %29 = arith.addf %26, %28 : vector<16x256xf32>
    %30 = arith.truncf %29 : vector<16x256xf32> to vector<16x256xbf16>
    %cst_23 = arith.constant 0.000000e+00 : bf16
    %31 = vector.broadcast %cst_23 : bf16 to vector<16x256xbf16>
    %32 = arith.maximumf %30, %31 : vector<16x256xbf16>
    %c0_24 = arith.constant 0 : index
    %c0_25 = arith.constant 0 : index
    %33 = vector.load %arg6[%c0_24, %c0_25] : memref<256x256xbf16, #tpu.memory_space<vmem>>, vector<256x256xbf16>
    %cst_26 = arith.constant dense<0.000000e+00> : vector<16x256xf32>
    %34 = tpu.matmul %32, %33, %cst_26 {dimension_numbers = #tpu.dot_dimension_numbers<[1], [0], [0], [1], [0, 0, 1, 1], [], []>} : vector<16x256xbf16>, vector<256x256xbf16>, vector<16x256xf32> -> vector<16x256xf32>
    %c0_27 = arith.constant 0 : index
    %c0_28 = arith.constant 0 : index
    %35 = vector.load %arg16[%c0_27, %c0_28] : memref<1x256xf32, #tpu.memory_space<vmem>>, vector<1x256xf32>
    %36 = vector.broadcast %35 : vector<1x256xf32> to vector<16x256xf32>
    %37 = arith.addf %34, %36 : vector<16x256xf32>
    %38 = arith.truncf %37 : vector<16x256xf32> to vector<16x256xbf16>
    %cst_29 = arith.constant 0.000000e+00 : bf16
    %39 = vector.broadcast %cst_29 : bf16 to vector<16x256xbf16>
    %40 = arith.maximumf %38, %39 : vector<16x256xbf16>
    %c0_30 = arith.constant 0 : index
    %c0_31 = arith.constant 0 : index
    %41 = vector.load %arg7[%c0_30, %c0_31] : memref<256x128xbf16, #tpu.memory_space<vmem>>, vector<256x128xbf16>
    %cst_32 = arith.constant dense<0.000000e+00> : vector<16x128xf32>
    %42 = tpu.matmul %40, %41, %cst_32 {dimension_numbers = #tpu.dot_dimension_numbers<[1], [0], [0], [1], [0, 0, 1, 1], [], []>} : vector<16x256xbf16>, vector<256x128xbf16>, vector<16x128xf32> -> vector<16x128xf32>
    %c0_33 = arith.constant 0 : index
    %c0_34 = arith.constant 0 : index
    %43 = vector.load %arg17[%c0_33, %c0_34] : memref<1x128xf32, #tpu.memory_space<vmem>>, vector<1x128xf32>
    %44 = vector.broadcast %43 : vector<1x128xf32> to vector<16x128xf32>
    %45 = arith.addf %42, %44 : vector<16x128xf32>
    %46 = arith.truncf %45 : vector<16x128xf32> to vector<16x128xbf16>
    %cst_35 = arith.constant 0.000000e+00 : bf16
    %47 = vector.broadcast %cst_35 : bf16 to vector<16x128xbf16>
    %48 = arith.maximumf %46, %47 : vector<16x128xbf16>
    %c0_36 = arith.constant 0 : index
    %c0_37 = arith.constant 0 : index
    %49 = vector.load %arg8[%c0_36, %c0_37] : memref<128x128xbf16, #tpu.memory_space<vmem>>, vector<128x128xbf16>
    %cst_38 = arith.constant dense<0.000000e+00> : vector<16x128xf32>
    %50 = tpu.matmul %48, %49, %cst_38 {dimension_numbers = #tpu.dot_dimension_numbers<[1], [0], [0], [1], [0, 0, 1, 1], [], []>} : vector<16x128xbf16>, vector<128x128xbf16>, vector<16x128xf32> -> vector<16x128xf32>
    %c0_39 = arith.constant 0 : index
    %c0_40 = arith.constant 0 : index
    %51 = vector.load %arg18[%c0_39, %c0_40] : memref<1x128xf32, #tpu.memory_space<vmem>>, vector<1x128xf32>
    %52 = vector.broadcast %51 : vector<1x128xf32> to vector<16x128xf32>
    %53 = arith.addf %50, %52 : vector<16x128xf32>
    %54 = arith.truncf %53 : vector<16x128xf32> to vector<16x128xbf16>
    %cst_41 = arith.constant 0.000000e+00 : f32
    %cst_42 = arith.constant 6.000000e+00 : f32
    %55 = arith.truncf %cst_41 : f32 to bf16
    %56 = vector.broadcast %55 : bf16 to vector<16x128xbf16>
    %57 = arith.maximumf %56, %54 : vector<16x128xbf16>
    %58 = arith.truncf %cst_42 : f32 to bf16
    %59 = vector.broadcast %58 : bf16 to vector<16x128xbf16>
    %60 = arith.minimumf %59, %57 : vector<16x128xbf16>
    %c0_43 = arith.constant 0 : index
    %c0_44 = arith.constant 0 : index
    %61 = vector.load %arg9[%c0_43, %c0_44] : memref<128x128xbf16, #tpu.memory_space<vmem>>, vector<128x128xbf16>
    %cst_45 = arith.constant dense<0.000000e+00> : vector<16x128xf32>
    %62 = tpu.matmul %60, %61, %cst_45 {dimension_numbers = #tpu.dot_dimension_numbers<[1], [0], [0], [1], [0, 0, 1, 1], [], []>} : vector<16x128xbf16>, vector<128x128xbf16>, vector<16x128xf32> -> vector<16x128xf32>
    %c0_46 = arith.constant 0 : index
    %c0_47 = arith.constant 0 : index
    %63 = vector.load %arg19[%c0_46, %c0_47] : memref<1x128xf32, #tpu.memory_space<vmem>>, vector<1x128xf32>
    %64 = vector.broadcast %63 : vector<1x128xf32> to vector<16x128xf32>
    %65 = arith.addf %62, %64 : vector<16x128xf32>
    %66 = arith.truncf %65 : vector<16x128xf32> to vector<16x128xbf16>
    %cst_48 = arith.constant 0.000000e+00 : f32
    %cst_49 = arith.constant 6.000000e+00 : f32
    %67 = arith.truncf %cst_48 : f32 to bf16
    %68 = vector.broadcast %67 : bf16 to vector<16x128xbf16>
    %69 = arith.maximumf %68, %66 : vector<16x128xbf16>
    %70 = arith.truncf %cst_49 : f32 to bf16
    %71 = vector.broadcast %70 : bf16 to vector<16x128xbf16>
    %72 = arith.minimumf %71, %69 : vector<16x128xbf16>
    %c0_50 = arith.constant 0 : index
    %c0_51 = arith.constant 0 : index
    %73 = vector.load %arg10[%c0_50, %c0_51] : memref<128x128xbf16, #tpu.memory_space<vmem>>, vector<128x128xbf16>
    %cst_52 = arith.constant dense<0.000000e+00> : vector<16x128xf32>
    %74 = tpu.matmul %72, %73, %cst_52 {dimension_numbers = #tpu.dot_dimension_numbers<[1], [0], [0], [1], [0, 0, 1, 1], [], []>} : vector<16x128xbf16>, vector<128x128xbf16>, vector<16x128xf32> -> vector<16x128xf32>
    %c0_53 = arith.constant 0 : index
    %c0_54 = arith.constant 0 : index
    %75 = vector.load %arg20[%c0_53, %c0_54] : memref<1x128xf32, #tpu.memory_space<vmem>>, vector<1x128xf32>
    %76 = vector.broadcast %75 : vector<1x128xf32> to vector<16x128xf32>
    %77 = arith.addf %74, %76 : vector<16x128xf32>
    %78 = arith.truncf %77 : vector<16x128xf32> to vector<16x128xbf16>
    %cst_55 = arith.constant 0.000000e+00 : f32
    %cst_56 = arith.constant 6.000000e+00 : f32
    %79 = arith.truncf %cst_55 : f32 to bf16
    %80 = vector.broadcast %79 : bf16 to vector<16x128xbf16>
    %81 = arith.maximumf %80, %78 : vector<16x128xbf16>
    %82 = arith.truncf %cst_56 : f32 to bf16
    %83 = vector.broadcast %82 : bf16 to vector<16x128xbf16>
    %84 = arith.minimumf %83, %81 : vector<16x128xbf16>
    %c0_57 = arith.constant 0 : index
    %c0_58 = arith.constant 0 : index
    %85 = vector.load %arg11[%c0_57, %c0_58] : memref<1x128xf32, #tpu.memory_space<vmem>>, vector<1x128xf32>
    %86 = arith.extf %84 : vector<16x128xbf16> to vector<16x128xf32>
    %87 = vector.broadcast %85 : vector<1x128xf32> to vector<16x128xf32>
    %88 = arith.mulf %86, %87 : vector<16x128xf32>
    %cst_59 = arith.constant dense<0.000000e+00> : vector<16xf32>
    %89 = vector.multi_reduction <add>, %88, %cst_59 [1] : vector<16x128xf32> to vector<16xf32>
    %90 = vector.shape_cast %89 : vector<16xf32> to vector<16x1xf32>
    %c0_60 = arith.constant 0 : index
    %c0_61 = arith.constant 0 : index
    %91 = vector.load %arg21[%c0_60, %c0_61] : memref<1x1xf32, #tpu.memory_space<vmem>>, vector<1x1xf32>
    %92 = vector.broadcast %91 : vector<1x1xf32> to vector<16x1xf32>
    %93 = arith.addf %90, %92 : vector<16x1xf32>
    %94 = arith.negf %93 : vector<16x1xf32>
    %95 = math.exp %94 : vector<16x1xf32>
    %cst_62 = arith.constant 1.000000e+00 : f32
    %96 = vector.broadcast %cst_62 : f32 to vector<16x1xf32>
    %97 = arith.addf %96, %95 : vector<16x1xf32>
    %98 = arith.divf %96, %97 : vector<16x1xf32>
    %c0_63 = arith.constant 0 : index
    %c0_64 = arith.constant 0 : index
    %99 = vector.load %arg22[%c0_63, %c0_64] : memref<16x1xf32, #tpu.memory_space<vmem>>, vector<16x1xf32>
    tpu.vector_store %arg22[%c0_63, %c0_64], %98 {strides = array<i32>} : memref<16x1xf32, #tpu.memory_space<vmem>>, vector<16x1xf32>,
    return
  }
  func.func @transform_0(%arg0: i32) -> (i32, i32) {
    %c0_i32 = arith.constant 0 : i32
    %c0_i32_0 = arith.constant 0 : i32
    return %arg0, %c0_i32 : i32, i32
  }
  func.func @transform_1(%arg0: i32) -> (i32, i32) {
    %c0_i32 = arith.constant 0 : i32
    %c0_i32_0 = arith.constant 0 : i32
    %c0_i32_1 = arith.constant 0 : i32
    return %c0_i32, %c0_i32_0 : i32, i32
  }
  func.func @transform_2(%arg0: i32) -> (i32, i32) {
    %c0_i32 = arith.constant 0 : i32
    %c0_i32_0 = arith.constant 0 : i32
    %c0_i32_1 = arith.constant 0 : i32
    return %c0_i32, %c0_i32_0 : i32, i32
  }
  func.func @transform_3(%arg0: i32) -> (i32, i32) {
    %c0_i32 = arith.constant 0 : i32
    %c0_i32_0 = arith.constant 0 : i32
    %c0_i32_1 = arith.constant 0 : i32
    return %c0_i32, %c0_i32_0 : i32, i32
  }
  func.func @transform_4(%arg0: i32) -> (i32, i32) {
    %c0_i32 = arith.constant 0 : i32
    %c0_i32_0 = arith.constant 0 : i32
    %c0_i32_1 = arith.constant 0 : i32
    return %c0_i32, %c0_i32_0 : i32, i32
  }
  func.func @transform_5(%arg0: i32) -> (i32, i32) {
    %c0_i32 = arith.constant 0 : i32
    %c0_i32_0 = arith.constant 0 : i32
    %c0_i32_1 = arith.constant 0 : i32
    return %c0_i32, %c0_i32_0 : i32, i32
  }
  func.func @transform_6(%arg0: i32) -> (i32, i32) {
    %c0_i32 = arith.constant 0 : i32
    %c0_i32_0 = arith.constant 0 : i32
    %c0_i32_1 = arith.constant 0 : i32
    return %c0_i32, %c0_i32_0 : i32, i32
  }
  func.func @transform_7(%arg0: i32) -> (i32, i32) {
    %c0_i32 = arith.constant 0 : i32
    %c0_i32_0 = arith.constant 0 : i32
    %c0_i32_1 = arith.constant 0 : i32
    return %c0_i32, %c0_i32_0 : i32, i32
  }
  func.func @transform_8(%arg0: i32) -> (i32, i32) {
    %c0_i32 = arith.constant 0 : i32
    %c0_i32_0 = arith.constant 0 : i32
    %c0_i32_1 = arith.constant 0 : i32
    return %c0_i32, %c0_i32_0 : i32, i32
  }
  func.func @transform_9(%arg0: i32) -> (i32, i32) {
    %c0_i32 = arith.constant 0 : i32
    %c0_i32_0 = arith.constant 0 : i32
    %c0_i32_1 = arith.constant 0 : i32
    return %c0_i32, %c0_i32_0 : i32, i32
  }
  func.func @transform_10(%arg0: i32) -> (i32, i32) {
    %c0_i32 = arith.constant 0 : i32
    %c0_i32_0 = arith.constant 0 : i32
    %c0_i32_1 = arith.constant 0 : i32
    return %c0_i32, %c0_i32_0 : i32, i32
  }
  func.func @transform_11(%arg0: i32) -> (i32, i32) {
    %c0_i32 = arith.constant 0 : i32
    %c0_i32_0 = arith.constant 0 : i32
    %c0_i32_1 = arith.constant 0 : i32
    return %c0_i32, %c0_i32_0 : i32, i32
  }
  func.func @transform_12(%arg0: i32) -> (i32, i32) {
    %c0_i32 = arith.constant 0 : i32
    %c0_i32_0 = arith.constant 0 : i32
    %c0_i32_1 = arith.constant 0 : i32
    return %c0_i32, %c0_i32_0 : i32, i32
  }
  func.func @transform_13(%arg0: i32) -> (i32, i32) {
    %c0_i32 = arith.constant 0 : i32
    %c0_i32_0 = arith.constant 0 : i32
    %c0_i32_1 = arith.constant 0 : i32
    return %c0_i32, %c0_i32_0 : i32, i32
  }
  func.func @transform_14(%arg0: i32) -> (i32, i32) {
    %c0_i32 = arith.constant 0 : i32
    %c0_i32_0 = arith.constant 0 : i32
    %c0_i32_1 = arith.constant 0 : i32
    return %c0_i32, %c0_i32_0 : i32, i32
  }
  func.func @transform_15(%arg0: i32) -> (i32, i32) {
    %c0_i32 = arith.constant 0 : i32
    %c0_i32_0 = arith.constant 0 : i32
    %c0_i32_1 = arith.constant 0 : i32
    return %c0_i32, %c0_i32_0 : i32, i32
  }
  func.func @transform_16(%arg0: i32) -> (i32, i32) {
    %c0_i32 = arith.constant 0 : i32
    %c0_i32_0 = arith.constant 0 : i32
    %c0_i32_1 = arith.constant 0 : i32
    return %c0_i32, %c0_i32_0 : i32, i32
  }
  func.func @transform_17(%arg0: i32) -> (i32, i32) {
    %c0_i32 = arith.constant 0 : i32
    %c0_i32_0 = arith.constant 0 : i32
    %c0_i32_1 = arith.constant 0 : i32
    return %c0_i32, %c0_i32_0 : i32, i32
  }
  func.func @transform_18(%arg0: i32) -> (i32, i32) {
    %c0_i32 = arith.constant 0 : i32
    %c0_i32_0 = arith.constant 0 : i32
    %c0_i32_1 = arith.constant 0 : i32
    return %c0_i32, %c0_i32_0 : i32, i32
  }
  func.func @transform_19(%arg0: i32) -> (i32, i32) {
    %c0_i32 = arith.constant 0 : i32
    %c0_i32_0 = arith.constant 0 : i32
    %c0_i32_1 = arith.constant 0 : i32
    return %c0_i32, %c0_i32_0 : i32, i32
  }
  func.func @transform_20(%arg0: i32) -> (i32, i32) {
    %c0_i32 = arith.constant 0 : i32
    %c0_i32_0 = arith.constant 0 : i32
    %c0_i32_1 = arith.constant 0 : i32
    return %c0_i32, %c0_i32_0 : i32, i32
  }
  func.func @transform_21(%arg0: i32) -> (i32, i32) {
    %c0_i32 = arith.constant 0 : i32
    %c0_i32_0 = arith.constant 0 : i32
    return %arg0, %c0_i32 : i32, i32
  }
}

</mosaic_0001>

<llo_original>
// kernel: pd_forward.1
$region0: #{pd_forward.1}
  #allocation0 [shape = 'u32[]', space=smem, size = 0x4, offset = 0x4, fixed_abs, tag = 'smem constant byte address 0x4 - core index']
  #allocation1 [shape = 'u32[72,128]{1,0:T(1,128)}', space=vmem, size = 0x9000, scoped, tag = 'internal scratch']
  #allocation2 [shape = 'f32[1,1]{1,0:T(1,128)S(1)}', space=vmem, size = 0x200, scoped, tag = 'scoped memory for pd_forward.1']
  %s0 = inlined_call_operand.vmem [shape: bf16[16,512], index: 0, kind: input, shape index: {}]
  %s1 = inlined_call_operand.hbm [shape: bf16[512,384], index: 1, kind: input, shape index: {}]
  %s2 = inlined_call_operand.hbm [shape: bf16[384,384], index: 2, kind: input, shape index: {}]
  %s3 = inlined_call_operand.hbm [shape: bf16[384,256], index: 3, kind: input, shape index: {}]
  %s4 = inlined_call_operand.hbm [shape: bf16[256,256], index: 4, kind: input, shape index: {}]
  %s5 = inlined_call_operand.hbm [shape: bf16[256,256], index: 5, kind: input, shape index: {}]
  %s6 = inlined_call_operand.hbm [shape: bf16[256,128], index: 6, kind: input, shape index: {}]
  %s7 = inlined_call_operand.vmem [shape: bf16[128,128], index: 7, kind: input, shape index: {}]
  %s8 = inlined_call_operand.hbm [shape: bf16[128,128], index: 8, kind: input, shape index: {}]
  %s9 = inlined_call_operand.hbm [shape: bf16[128,128], index: 9, kind: input, shape index: {}]
  %s10 = inlined_call_operand.hbm [shape: f32[1,128], index: 10, kind: input, shape index: {}]
  %s11 = inlined_call_operand.vmem [shape: f32[1,384], index: 11, kind: input, shape index: {}]
  %s12 = inlined_call_operand.vmem [shape: f32[1,384], index: 12, kind: input, shape index: {}]
  %s13 = inlined_call_operand.vmem [shape: f32[1,256], index: 13, kind: input, shape index: {}]
  %s14 = inlined_call_operand.vmem [shape: f32[1,256], index: 14, kind: input, shape index: {}]
  %s15 = inlined_call_operand.vmem [shape: f32[1,256], index: 15, kind: input, shape index: {}]
  %s16 = inlined_call_operand.vmem [shape: f32[1,128], index: 16, kind: input, shape index: {}]
  %s17 = inlined_call_operand.vmem [shape: f32[1,128], index: 17, kind: input, shape index: {}]
  %s18 = inlined_call_operand.vmem [shape: f32[1,128], index: 18, kind: input, shape index: {}]
  %s19 = inlined_call_operand.vmem [shape: f32[1,128], index: 19, kind: input, shape index: {}]
  %s20 = inlined_call_operand.<no memory space> [shape: f32[1,1], index: 20, kind: input, shape index: {}]
  %s21 = inlined_call_operand.vmem [shape: f32[16,1], index: 21, kind: output, shape index: {}]
  %s22 = sld [smem:[#allocation0]]
  $region130: #{pd_forward.1} parent=0
    _
  %s24 = ssub.s32 1, %s22
  %s25 = scalar_select 0, %s24, %s22
  %v26 = vstv %s20
  %27 = vst [vmem:[#allocation2] sm:$0x1] %v26
  $region1: #{pd_forward.1} parent=0
    #allocation3 [shape = 'u8[393216]{0}', space=vmem, size = 0x60000, scoped, tag = 'input window, operand 1, single buffered']
    #allocation4 [shape = 's32[1]{0}', space=sflag, size = 0x4, scoped, tag = 'scoped memory for pd_forward.1']
    #allocation5 [shape = 'u8[294912]{0}', space=vmem, size = 0x48000, scoped, tag = 'input window, operand 2, single buffered']
    #allocation6 [shape = 's32[1]{0}', space=sflag, size = 0x4, scoped, tag = 'scoped memory for pd_forward.1']
    #allocation7 [shape = 'u8[196608]{0}', space=vmem, size = 0x30000, scoped, tag = 'input window, operand 3, single buffered']
    #allocation8 [shape = 'u8[131072]{0}', space=vmem, size = 0x20000, scoped, tag = 'input window, operand 4, single buffered']
    #allocation9 [shape = 's32[1]{0}', space=sflag, size = 0x4, scoped, tag = 'scoped memory for pd_forward.1']
    #allocation10 [shape = 'u8[131072]{0}', space=vmem, size = 0x20000, scoped, tag = 'input window, operand 5, single buffered']
    #allocation11 [shape = 'u8[65536]{0}', space=vmem, size = 0x10000, scoped, tag = 'input window, operand 6, single buffered']
    #allocation12 [shape = 's32[1]{0}', space=sflag, size = 0x4, scoped, tag = 'scoped memory for pd_forward.1']
    #allocation13 [shape = 'u8[32768]{0}', space=vmem, size = 0x8000, scoped, tag = 'input window, operand 8, single buffered']
    #allocation14 [shape = 'u8[32768]{0}', space=vmem, size = 0x8000, scoped, tag = 'input window, operand 9, single buffered']
    #allocation15 [shape = 's32[1]{0}', space=sflag, size = 0x4, scoped, tag = 'scoped memory for pd_forward.1']
    #allocation16 [shape = 'u8[512]{0}', space=vmem, size = 0x400, scoped, tag = 'input window, operand 10, single buffered']
    %28 = vsyncpa [#allocation4], 0
    %29 = vsyncpa [#allocation6], 0
    %30 = vsyncpa [#allocation9], 0
    %31 = vsyncpa [#allocation12], 0
    %32 = vsyncpa [#allocation15], 0
    // Predicated region
    $region2: #{pd_forward.1} parent=1 // pred_check
      _
    $region3: #{pd_forward.1} parent=1 // pred_check_branch
      %34 = sbr.rel (0) target = $region5
    $region4: #{pd_forward.1} parent=1 // pred_region
      _
    $region5: #{pd_forward.1} parent=1 // pred_fallthru
      _
    // Predicated region
    $region6: #{pd_forward.1} parent=1 // pred_check
      _
    $region7: #{pd_forward.1} parent=1 // pred_check_branch
      %36 = sbr.rel (0) target = $region9
    $region8: #{pd_forward.1} parent=1 // pred_region
      %38 = vsyncadd [#allocation4], 0
      %s39 = sshll.u32 %s1, 4
      %s40 = int_to_ptr.hbm [resolvable:$true] %s39
      %s41 = sshll.u32 [#allocation3], 4
      %s42 = int_to_ptr.vmem [resolvable:$true] %s41
      %47 = dma.hbm_to_vmem [thread:$0]  %s40, 12288, %s42, [#allocation4], 192, 192, 12
    $region9: #{pd_forward.1} parent=1 // pred_fallthru
      _
    // Predicated region
    $region10: #{pd_forward.1} parent=1 // pred_check
      _
    $region11: #{pd_forward.1} parent=1 // pred_check_branch
      %49 = sbr.rel (0) target = $region13
    $region12: #{pd_forward.1} parent=1 // pred_region
      %51 = vsyncadd [#allocation6], 0
      %s52 = sshll.u32 %s2, 4
      %s53 = int_to_ptr.hbm [resolvable:$true] %s52
      %s54 = sshll.u32 [#allocation5], 4
      %s55 = int_to_ptr.vmem [resolvable:$true] %s54
      %60 = dma.hbm_to_vmem [thread:$0]  %s53, 9216, %s55, [#allocation6], 192, 192, 12
    $region13: #{pd_forward.1} parent=1 // pred_fallthru
      _
    // Predicated region
    $region14: #{pd_forward.1} parent=1 // pred_check
      _
    $region15: #{pd_forward.1} parent=1 // pred_check_branch
      %62 = sbr.rel (0) target = $region17
    $region16: #{pd_forward.1} parent=1 // pred_region
      %64 = vsyncadd [#allocation6], 0
      %s65 = sshll.u32 %s3, 4
      %s66 = int_to_ptr.hbm [resolvable:$true] %s65
      %s67 = sshll.u32 [#allocation7], 4
      %s68 = int_to_ptr.vmem [resolvable:$true] %s67
      %73 = dma.hbm_to_vmem [thread:$0]  %s66, 6144, %s68, [#allocation6], 128, 128, 8
    $region17: #{pd_forward.1} parent=1 // pred_fallthru
      _
    // Predicated region
    $region18: #{pd_forward.1} parent=1 // pred_check
      _
    $region19: #{pd_forward.1} parent=1 // pred_check_branch
      %75 = sbr.rel (0) target = $region21
    $region20: #{pd_forward.1} parent=1 // pred_region
      %77 = vsyncadd [#allocation9], 0
      %s78 = sshll.u32 %s4, 4
      %s79 = int_to_ptr.hbm [resolvable:$true] %s78
      %s80 = sshll.u32 [#allocation8], 4
      %s81 = int_to_ptr.vmem [resolvable:$true] %s80
      %86 = dma.hbm_to_vmem [thread:$0]  %s79, 4096, %s81, [#allocation9], 128, 128, 8
    $region21: #{pd_forward.1} parent=1 // pred_fallthru
      _
    // Predicated region
    $region22: #{pd_forward.1} parent=1 // pred_check
      _
    $region23: #{pd_forward.1} parent=1 // pred_check_branch
      %88 = sbr.rel (0) target = $region25
    $region24: #{pd_forward.1} parent=1 // pred_region
      %90 = vsyncadd [#allocation9], 0
      %s91 = sshll.u32 %s5, 4
      %s92 = int_to_ptr.hbm [resolvable:$true] %s91
      %s93 = sshll.u32 [#allocation10], 4
      %s94 = int_to_ptr.vmem [resolvable:$true] %s93
      %99 = dma.hbm_to_vmem [thread:$0]  %s92, 4096, %s94, [#allocation9], 128, 128, 8
    $region25: #{pd_forward.1} parent=1 // pred_fallthru
      _
    // Predicated region
    $region26: #{pd_forward.1} parent=1 // pred_check
      _
    $region27: #{pd_forward.1} parent=1 // pred_check_branch
      %101 = sbr.rel (0) target = $region29
    $region28: #{pd_forward.1} parent=1 // pred_region
      %103 = vsyncadd [#allocation12], 0
      %s104 = sshll.u32 %s6, 4
      %s105 = int_to_ptr.hbm [resolvable:$true] %s104
      %s106 = sshll.u32 [#allocation11], 4
      %s107 = int_to_ptr.vmem [resolvable:$true] %s106
      %112 = dma.hbm_to_vmem [thread:$0]  %s105, 2048, %s107, [#allocation12], 64, 64, 4
    $region29: #{pd_forward.1} parent=1 // pred_fallthru
      _
    // Predicated region
    $region30: #{pd_forward.1} parent=1 // pred_check
      _
    $region31: #{pd_forward.1} parent=1 // pred_check_branch
      %114 = sbr.rel (0) target = $region33
    $region32: #{pd_forward.1} parent=1 // pred_region
      _
    $region33: #{pd_forward.1} parent=1 // pred_fallthru
      _
    // Predicated region
    $region34: #{pd_forward.1} parent=1 // pred_check
      _
    $region35: #{pd_forward.1} parent=1 // pred_check_branch
      %116 = sbr.rel (0) target = $region37
    $region36: #{pd_forward.1} parent=1 // pred_region
      %118 = vsyncadd [#allocation12], 0
      %s119 = sshll.u32 %s8, 4
      %s120 = int_to_ptr.hbm [resolvable:$true] %s119
      %s121 = sshll.u32 [#allocation13], 4
      %s122 = int_to_ptr.vmem [resolvable:$true] %s121
      %127 = dma.hbm_to_vmem [thread:$0]  %s120, 1024, %s122, [#allocation12], 64, 64, 4
    $region37: #{pd_forward.1} parent=1 // pred_fallthru
      _
    // Predicated region
    $region38: #{pd_forward.1} parent=1 // pred_check
      _
    $region39: #{pd_forward.1} parent=1 // pred_check_branch
      %129 = sbr.rel (0) target = $region41
    $region40: #{pd_forward.1} parent=1 // pred_region
      %131 = vsyncadd [#allocation15], 0
      %s132 = sshll.u32 %s9, 4
      %s133 = int_to_ptr.hbm [resolvable:$true] %s132
      %s134 = sshll.u32 [#allocation14], 4
      %s135 = int_to_ptr.vmem [resolvable:$true] %s134
      %140 = dma.hbm_to_vmem [thread:$0]  %s133, 1024, %s135, [#allocation15], 64, 64, 4
    $region41: #{pd_forward.1} parent=1 // pred_fallthru
      _
    // Predicated region
    $region42: #{pd_forward.1} parent=1 // pred_check
      _
    $region43: #{pd_forward.1} parent=1 // pred_check_branch
      %142 = sbr.rel (0) target = $region45
    $region44: #{pd_forward.1} parent=1 // pred_region
      %144 = vsyncadd [#allocation15], 0
      %s146 = sshll.u32 %s10, 4
      %s147 = int_to_ptr.hbm [resolvable:$true] %s146
      %s148 = sshll.u32 [#allocation16], 4
      %s149 = int_to_ptr.vmem [resolvable:$true] %s148
      %151 = dma.hbm_to_vmem [thread:$0]  %s147, 16, %s149, [#allocation15]
    $region45: #{pd_forward.1} parent=1 // pred_fallthru
      _
    // Predicated region
    $region46: #{pd_forward.1} parent=1 // pred_check
      _
    $region47: #{pd_forward.1} parent=1 // pred_check_branch
      %153 = sbr.rel (0) target = $region49
    $region48: #{pd_forward.1} parent=1 // pred_region
      _
    $region49: #{pd_forward.1} parent=1 // pred_fallthru
      _
    // Predicated region
    $region50: #{pd_forward.1} parent=1 // pred_check
      _
    $region51: #{pd_forward.1} parent=1 // pred_check_branch
      %155 = sbr.rel (0) target = $region53
    $region52: #{pd_forward.1} parent=1 // pred_region
      _
    $region53: #{pd_forward.1} parent=1 // pred_fallthru
      _
    // Predicated region
    $region54: #{pd_forward.1} parent=1 // pred_check
      _
    $region55: #{pd_forward.1} parent=1 // pred_check_branch
      %157 = sbr.rel (0) target = $region57
    $region56: #{pd_forward.1} parent=1 // pred_region
      _
    $region57: #{pd_forward.1} parent=1 // pred_fallthru
      _
    // Predicated region
    $region58: #{pd_forward.1} parent=1 // pred_check
      _
    $region59: #{pd_forward.1} parent=1 // pred_check_branch
      %159 = sbr.rel (0) target = $region61
    $region60: #{pd_forward.1} parent=1 // pred_region
      _
    $region61: #{pd_forward.1} parent=1 // pred_fallthru
      _
    // Predicated region
    $region62: #{pd_forward.1} parent=1 // pred_check
      _
    $region63: #{pd_forward.1} parent=1 // pred_check_branch
      %161 = sbr.rel (0) target = $region65
    $region64: #{pd_forward.1} parent=1 // pred_region
      _
    $region65: #{pd_forward.1} parent=1 // pred_fallthru
      _
    // Predicated region
    $region66: #{pd_forward.1} parent=1 // pred_check
      _
    $region67: #{pd_forward.1} parent=1 // pred_check_branch
      %163 = sbr.rel (0) target = $region69
    $region68: #{pd_forward.1} parent=1 // pred_region
      _
    $region69: #{pd_forward.1} parent=1 // pred_fallthru
      _
    // Predicated region
    $region70: #{pd_forward.1} parent=1 // pred_check
      _
    $region71: #{pd_forward.1} parent=1 // pred_check_branch
      %165 = sbr.rel (0) target = $region73
    $region72: #{pd_forward.1} parent=1 // pred_region
      _
    $region73: #{pd_forward.1} parent=1 // pred_fallthru
      _
    // Predicated region
    $region74: #{pd_forward.1} parent=1 // pred_check
      _
    $region75: #{pd_forward.1} parent=1 // pred_check_branch
      %167 = sbr.rel (0) target = $region77
    $region76: #{pd_forward.1} parent=1 // pred_region
      _
    $region77: #{pd_forward.1} parent=1 // pred_fallthru
      _
    // Predicated region
    $region78: #{pd_forward.1} parent=1 // pred_check
      _
    $region79: #{pd_forward.1} parent=1 // pred_check_branch
      %169 = sbr.rel (0) target = $region81
    $region80: #{pd_forward.1} parent=1 // pred_region
      _
    $region81: #{pd_forward.1} parent=1 // pred_fallthru
      _
    // Predicated region
    $region82: #{pd_forward.1} parent=1 // pred_check
      _
    $region83: #{pd_forward.1} parent=1 // pred_check_branch
      %171 = sbr.rel (0) target = $region85
    $region84: #{pd_forward.1} parent=1 // pred_region
      _
    $region85: #{pd_forward.1} parent=1 // pred_fallthru
      _
    // Predicated region
    $region86: #{pd_forward.1} parent=1 // pred_check
      _
    $region87: #{pd_forward.1} parent=1 // pred_check_branch
      %173 = sbr.rel (0) target = $region89
    $region88: #{pd_forward.1} parent=1 // pred_region
      %175 = dma.done [#allocation4], 12288
    $region89: #{pd_forward.1} parent=1 // pred_fallthru
      _
    // Predicated region
    $region90: #{pd_forward.1} parent=1 // pred_check
      _
    $region91: #{pd_forward.1} parent=1 // pred_check_branch
      %177 = sbr.rel (0) target = $region93
    $region92: #{pd_forward.1} parent=1 // pred_region
      %179 = dma.done [#allocation6], 9216
    $region93: #{pd_forward.1} parent=1 // pred_fallthru
      _
    // Predicated region
    $region94: #{pd_forward.1} parent=1 // pred_check
      _
    $region95: #{pd_forward.1} parent=1 // pred_check_branch
      %181 = sbr.rel (0) target = $region97
    $region96: #{pd_forward.1} parent=1 // pred_region
      %183 = dma.done [#allocation6], 6144
    $region97: #{pd_forward.1} parent=1 // pred_fallthru
      _
    // Predicated region
    $region98: #{pd_forward.1} parent=1 // pred_check
      _
    $region99: #{pd_forward.1} parent=1 // pred_check_branch
      %185 = sbr.rel (0) target = $region101
    $region100: #{pd_forward.1} parent=1 // pred_region
      %187 = dma.done [#allocation9], 4096
    $region101: #{pd_forward.1} parent=1 // pred_fallthru
      _
    // Predicated region
    $region102: #{pd_forward.1} parent=1 // pred_check
      _
    $region103: #{pd_forward.1} parent=1 // pred_check_branch
      %189 = sbr.rel (0) target = $region105
    $region104: #{pd_forward.1} parent=1 // pred_region
      %191 = dma.done [#allocation9], 4096
    $region105: #{pd_forward.1} parent=1 // pred_fallthru
      _
    // Predicated region
    $region106: #{pd_forward.1} parent=1 // pred_check
      _
    $region107: #{pd_forward.1} parent=1 // pred_check_branch
      %193 = sbr.rel (0) target = $region109
    $region108: #{pd_forward.1} parent=1 // pred_region
      %195 = dma.done [#allocation12], 2048
    $region109: #{pd_forward.1} parent=1 // pred_fallthru
      _
    // Predicated region
    $region110: #{pd_forward.1} parent=1 // pred_check
      _
    $region111: #{pd_forward.1} parent=1 // pred_check_branch
      %197 = sbr.rel (0) target = $region113
    $region112: #{pd_forward.1} parent=1 // pred_region
      %199 = dma.done [#allocation12], 1024
    $region113: #{pd_forward.1} parent=1 // pred_fallthru
      _
    // Predicated region
    $region114: #{pd_forward.1} parent=1 // pred_check
      _
    $region115: #{pd_forward.1} parent=1 // pred_check_branch
      %201 = sbr.rel (0) target = $region117
    $region116: #{pd_forward.1} parent=1 // pred_region
      %203 = dma.done [#allocation15], 1024
    $region117: #{pd_forward.1} parent=1 // pred_fallthru
      _
    // Predicated region
    $region118: #{pd_forward.1} parent=1 // pred_check
      _
    $region119: #{pd_forward.1} parent=1 // pred_check_branch
      %205 = sbr.rel (0) target = $region121
    $region120: #{pd_forward.1} parent=1 // pred_region
      %207 = dma.done [#allocation15], 16
    $region121: #{pd_forward.1} parent=1 // pred_fallthru
      _
    %v208 = vld [vmem:[%s0] sm:$0xff]
    %v209 = vld [vmem:[%s0 + $0x8] sm:$0xff]
    %v210 = vld [vmem:[%s0 + $0x10] sm:$0xff]
    %v211 = vld [vmem:[%s0 + $0x18] sm:$0xff]
    %v212 = vld [vmem:[#allocation3] sm:$0xff]
    %v213 = vld [vmem:[#allocation3 + $0x8] sm:$0xf]
    %v214 = vld [vmem:[#allocation3 + $0xc] sm:$0xff]
    %v215 = vld [vmem:[#allocation3 + $0x14] sm:$0xf]
    %v216 = vld [vmem:[#allocation3 + $0x18] sm:$0xff]
    %v217 = vld [vmem:[#allocation3 + $0x20] sm:$0xf]
    %v218 = vld [vmem:[#allocation3 + $0x24] sm:$0xff]
    %v219 = vld [vmem:[#allocation3 + $0x2c] sm:$0xf]
    %v220 = vld [vmem:[#allocation3 + $0x30] sm:$0xff]
    %v221 = vld [vmem:[#allocation3 + $0x38] sm:$0xf]
    %v222 = vld [vmem:[#allocation3 + $0x3c] sm:$0xff]
    %v223 = vld [vmem:[#allocation3 + $0x44] sm:$0xf]
    %v224 = vld [vmem:[#allocation3 + $0x48] sm:$0xff]
    %v225 = vld [vmem:[#allocation3 + $0x50] sm:$0xf]
    %v226 = vld [vmem:[#allocation3 + $0x54] sm:$0xff]
    %v227 = vld [vmem:[#allocation3 + $0x5c] sm:$0xf]
    %v228 = vld [vmem:[#allocation3 + $0x60] sm:$0xff]
    %v229 = vld [vmem:[#allocation3 + $0x68] sm:$0xf]
    %v230 = vld [vmem:[#allocation3 + $0x6c] sm:$0xff]
    %v231 = vld [vmem:[#allocation3 + $0x74] sm:$0xf]
    %v232 = vld [vmem:[#allocation3 + $0x78] sm:$0xff]
    %v233 = vld [vmem:[#allocation3 + $0x80] sm:$0xf]
    %v234 = vld [vmem:[#allocation3 + $0x84] sm:$0xff]
    %v235 = vld [vmem:[#allocation3 + $0x8c] sm:$0xf]
    %v236 = vld [vmem:[#allocation3 + $0x90] sm:$0xff]
    %v237 = vld [vmem:[#allocation3 + $0x98] sm:$0xf]
    %v238 = vld [vmem:[#allocation3 + $0x9c] sm:$0xff]
    %v239 = vld [vmem:[#allocation3 + $0xa4] sm:$0xf]
    %v240 = vld [vmem:[#allocation3 + $0xa8] sm:$0xff]
    %v241 = vld [vmem:[#allocation3 + $0xb0] sm:$0xf]
    %v242 = vld [vmem:[#allocation3 + $0xb4] sm:$0xff]
    %v243 = vld [vmem:[#allocation3 + $0xbc] sm:$0xf]
    %v244 = vld [vmem:[#allocation3 + $0xc0] sm:$0xff]
    %v245 = vld [vmem:[#allocation3 + $0xc8] sm:$0xf]
    %v246 = vld [vmem:[#allocation3 + $0xcc] sm:$0xff]
    %v247 = vld [vmem:[#allocation3 + $0xd4] sm:$0xf]
    %v248 = vld [vmem:[#allocation3 + $0xd8] sm:$0xff]
    %v249 = vld [vmem:[#allocation3 + $0xe0] sm:$0xf]
    %v250 = vld [vmem:[#allocation3 + $0xe4] sm:$0xff]
    %v251 = vld [vmem:[#allocation3 + $0xec] sm:$0xf]
    %v252 = vld [vmem:[#allocation3 + $0xf0] sm:$0xff]
    %v253 = vld [vmem:[#allocation3 + $0xf8] sm:$0xf]
    %v254 = vld [vmem:[#allocation3 + $0xfc] sm:$0xff]
    %v255 = vld [vmem:[#allocation3 + $0x104] sm:$0xf]
    %v256 = vld [vmem:[#allocation3 + $0x108] sm:$0xff]
    %v257 = vld [vmem:[#allocation3 + $0x110] sm:$0xf]
    %v258 = vld [vmem:[#allocation3 + $0x114] sm:$0xff]
    %v259 = vld [vmem:[#allocation3 + $0x11c] sm:$0xf]
    %v260 = vld [vmem:[#allocation3 + $0x120] sm:$0xff]
    %v261 = vld [vmem:[#allocation3 + $0x128] sm:$0xf]
    %v262 = vld [vmem:[#allocation3 + $0x12c] sm:$0xff]
    %v263 = vld [vmem:[#allocation3 + $0x134] sm:$0xf]
    %v264 = vld [vmem:[#allocation3 + $0x138] sm:$0xff]
    %v265 = vld [vmem:[#allocation3 + $0x140] sm:$0xf]
    %v266 = vld [vmem:[#allocation3 + $0x144] sm:$0xff]
    %v267 = vld [vmem:[#allocation3 + $0x14c] sm:$0xf]
    %v268 = vld [vmem:[#allocation3 + $0x150] sm:$0xff]
    %v269 = vld [vmem:[#allocation3 + $0x158] sm:$0xf]
    %v270 = vld [vmem:[#allocation3 + $0x15c] sm:$0xff]
    %v271 = vld [vmem:[#allocation3 + $0x164] sm:$0xf]
    %v272 = vld [vmem:[#allocation3 + $0x168] sm:$0xff]
    %v273 = vld [vmem:[#allocation3 + $0x170] sm:$0xf]
    %v274 = vld [vmem:[#allocation3 + $0x174] sm:$0xff]
    %v275 = vld [vmem:[#allocation3 + $0x17c] sm:$0xf]
    %v276 = vld [vmem:[#allocation3 + $0x180] sm:$0xff]
    %v277 = vld [vmem:[#allocation3 + $0x188] sm:$0xf]
    %v278 = vld [vmem:[#allocation3 + $0x18c] sm:$0xff]
    %v279 = vld [vmem:[#allocation3 + $0x194] sm:$0xf]
    %v280 = vld [vmem:[#allocation3 + $0x198] sm:$0xff]
    %v281 = vld [vmem:[#allocation3 + $0x1a0] sm:$0xf]
    %v282 = vld [vmem:[#allocation3 + $0x1a4] sm:$0xff]
    %v283 = vld [vmem:[#allocation3 + $0x1ac] sm:$0xf]
    %v284 = vld [vmem:[#allocation3 + $0x1b0] sm:$0xff]
    %v285 = vld [vmem:[#allocation3 + $0x1b8] sm:$0xf]
    %v286 = vld [vmem:[#allocation3 + $0x1bc] sm:$0xff]
    %v287 = vld [vmem:[#allocation3 + $0x1c4] sm:$0xf]
    %v288 = vld [vmem:[#allocation3 + $0x1c8] sm:$0xff]
    %v289 = vld [vmem:[#allocation3 + $0x1d0] sm:$0xf]
    %v290 = vld [vmem:[#allocation3 + $0x1d4] sm:$0xff]
    %v291 = vld [vmem:[#allocation3 + $0x1dc] sm:$0xf]
    %v292 = vld [vmem:[#allocation3 + $0x1e0] sm:$0xff]
    %v293 = vld [vmem:[#allocation3 + $0x1e8] sm:$0xf]
    %v294 = vld [vmem:[#allocation3 + $0x1ec] sm:$0xff]
    %v295 = vld [vmem:[#allocation3 + $0x1f4] sm:$0xf]
    %v296 = vld [vmem:[#allocation3 + $0x1f8] sm:$0xff]
    %v297 = vld [vmem:[#allocation3 + $0x200] sm:$0xf]
    %v298 = vld [vmem:[#allocation3 + $0x204] sm:$0xff]
    %v299 = vld [vmem:[#allocation3 + $0x20c] sm:$0xf]
    %v300 = vld [vmem:[#allocation3 + $0x210] sm:$0xff]
    %v301 = vld [vmem:[#allocation3 + $0x218] sm:$0xf]
    %v302 = vld [vmem:[#allocation3 + $0x21c] sm:$0xff]
    %v303 = vld [vmem:[#allocation3 + $0x224] sm:$0xf]
    %v304 = vld [vmem:[#allocation3 + $0x228] sm:$0xff]
    %v305 = vld [vmem:[#allocation3 + $0x230] sm:$0xf]
    %v306 = vld [vmem:[#allocation3 + $0x234] sm:$0xff]
    %v307 = vld [vmem:[#allocation3 + $0x23c] sm:$0xf]
    %v308 = vld [vmem:[#allocation3 + $0x240] sm:$0xff]
    %v309 = vld [vmem:[#allocation3 + $0x248] sm:$0xf]
    %v310 = vld [vmem:[#allocation3 + $0x24c] sm:$0xff]
    %v311 = vld [vmem:[#allocation3 + $0x254] sm:$0xf]
    %v312 = vld [vmem:[#allocation3 + $0x258] sm:$0xff]
    %v313 = vld [vmem:[#allocation3 + $0x260] sm:$0xf]
    %v314 = vld [vmem:[#allocation3 + $0x264] sm:$0xff]
    %v315 = vld [vmem:[#allocation3 + $0x26c] sm:$0xf]
    %v316 = vld [vmem:[#allocation3 + $0x270] sm:$0xff]
    %v317 = vld [vmem:[#allocation3 + $0x278] sm:$0xf]
    %v318 = vld [vmem:[#allocation3 + $0x27c] sm:$0xff]
    %v319 = vld [vmem:[#allocation3 + $0x284] sm:$0xf]
    %v320 = vld [vmem:[#allocation3 + $0x288] sm:$0xff]
    %v321 = vld [vmem:[#allocation3 + $0x290] sm:$0xf]
    %v322 = vld [vmem:[#allocation3 + $0x294] sm:$0xff]
    %v323 = vld [vmem:[#allocation3 + $0x29c] sm:$0xf]
    %v324 = vld [vmem:[#allocation3 + $0x2a0] sm:$0xff]
    %v325 = vld [vmem:[#allocation3 + $0x2a8] sm:$0xf]
    %v326 = vld [vmem:[#allocation3 + $0x2ac] sm:$0xff]
    %v327 = vld [vmem:[#allocation3 + $0x2b4] sm:$0xf]
    %v328 = vld [vmem:[#allocation3 + $0x2b8] sm:$0xff]
    %v329 = vld [vmem:[#allocation3 + $0x2c0] sm:$0xf]
    %v330 = vld [vmem:[#allocation3 + $0x2c4] sm:$0xff]
    %v331 = vld [vmem:[#allocation3 + $0x2cc] sm:$0xf]
    %v332 = vld [vmem:[#allocation3 + $0x2d0] sm:$0xff]
    %v333 = vld [vmem:[#allocation3 + $0x2d8] sm:$0xf]
    %v334 = vld [vmem:[#allocation3 + $0x2dc] sm:$0xff]
    %v335 = vld [vmem:[#allocation3 + $0x2e4] sm:$0xf]
    %v336 = vld [vmem:[#allocation3 + $0x2e8] sm:$0xff]
    %v337 = vld [vmem:[#allocation3 + $0x2f0] sm:$0xf]
    %v338 = vld [vmem:[#allocation3 + $0x2f4] sm:$0xff]
    %v339 = vld [vmem:[#allocation3 + $0x2fc] sm:$0xf]
    %v340 = vld [vmem:[%s11] sm:$0x7]
    %v342 = vperm.slane %v340, 0
    %v343 = vperm.slane %v340, 1
    %v344 = vperm.slane %v340, 2
    %v352 = vunpack.c.l.b16 %v208
    %v353 = vunpack.c.h.b16 %v208
    %v354 = vunpack.c.l.b16 %v209
    %v355 = vunpack.c.h.b16 %v209
    %v356 = vunpack.c.l.b16 %v210
    %v357 = vunpack.c.h.b16 %v210
    %v358 = vunpack.c.l.b16 %v211
    %v359 = vunpack.c.h.b16 %v211
    %v360 = vpack.c.b16 %v356, %v352
    %v361 = vpack.c.b16 %v357, %v353
    %v362 = vpack.c.b16 %v358, %v354
    %v363 = vpack.c.b16 %v359, %v355
    %v496 = vunpack.c.l.b16 %v212
    %v497 = vunpack.c.h.b16 %v212
    %v498 = vunpack.c.l.b16 %v213
    %v499 = vunpack.c.l.b16 %v214
    %v500 = vunpack.c.h.b16 %v214
    %v501 = vunpack.c.l.b16 %v215
    %v502 = vunpack.c.l.b16 %v216
    %v503 = vunpack.c.h.b16 %v216
    %v504 = vunpack.c.l.b16 %v217
    %v505 = vunpack.c.l.b16 %v218
    %v506 = vunpack.c.h.b16 %v218
    %v507 = vunpack.c.l.b16 %v219
    %v508 = vunpack.c.l.b16 %v220
    %v509 = vunpack.c.h.b16 %v220
    %v510 = vunpack.c.l.b16 %v221
    %v511 = vunpack.c.l.b16 %v222
    %v512 = vunpack.c.h.b16 %v222
    %v513 = vunpack.c.l.b16 %v223
    %v514 = vunpack.c.l.b16 %v224
    %v515 = vunpack.c.h.b16 %v224
    %v516 = vunpack.c.l.b16 %v225
    %v517 = vunpack.c.l.b16 %v226
    %v518 = vunpack.c.h.b16 %v226
    %v519 = vunpack.c.l.b16 %v227
    %v520 = vunpack.c.l.b16 %v228
    %v521 = vunpack.c.h.b16 %v228
    %v522 = vunpack.c.l.b16 %v229
    %v523 = vunpack.c.l.b16 %v230
    %v524 = vunpack.c.h.b16 %v230
    %v525 = vunpack.c.l.b16 %v231
    %v526 = vunpack.c.l.b16 %v232
    %v527 = vunpack.c.h.b16 %v232
    %v528 = vunpack.c.l.b16 %v233
    %v529 = vunpack.c.l.b16 %v234
    %v530 = vunpack.c.h.b16 %v234
    %v531 = vunpack.c.l.b16 %v235
    %v532 = vunpack.c.l.b16 %v236
    %v533 = vunpack.c.h.b16 %v236
    %v534 = vunpack.c.l.b16 %v237
    %v535 = vunpack.c.l.b16 %v238
    %v536 = vunpack.c.h.b16 %v238
    %v537 = vunpack.c.l.b16 %v239
    %v538 = vunpack.c.l.b16 %v240
    %v539 = vunpack.c.h.b16 %v240
    %v540 = vunpack.c.l.b16 %v241
    %v541 = vunpack.c.l.b16 %v242
    %v542 = vunpack.c.h.b16 %v242
    %v543 = vunpack.c.l.b16 %v243
    %v544 = vunpack.c.l.b16 %v244
    %v545 = vunpack.c.h.b16 %v244
    %v546 = vunpack.c.l.b16 %v245
    %v547 = vunpack.c.l.b16 %v246
    %v548 = vunpack.c.h.b16 %v246
    %v549 = vunpack.c.l.b16 %v247
    %v550 = vunpack.c.l.b16 %v248
    %v551 = vunpack.c.h.b16 %v248
    %v552 = vunpack.c.l.b16 %v249
    %v553 = vunpack.c.l.b16 %v250
    %v554 = vunpack.c.h.b16 %v250
    %v555 = vunpack.c.l.b16 %v251
    %v556 = vunpack.c.l.b16 %v252
    %v557 = vunpack.c.h.b16 %v252
    %v558 = vunpack.c.l.b16 %v253
    %v559 = vunpack.c.l.b16 %v254
    %v560 = vunpack.c.h.b16 %v254
    %v561 = vunpack.c.l.b16 %v255
    %v562 = vunpack.c.l.b16 %v256
    %v563 = vunpack.c.h.b16 %v256
    %v564 = vunpack.c.l.b16 %v257
    %v565 = vunpack.c.l.b16 %v258
    %v566 = vunpack.c.h.b16 %v258
    %v567 = vunpack.c.l.b16 %v259
    %v568 = vunpack.c.l.b16 %v260
    %v569 = vunpack.c.h.b16 %v260
    %v570 = vunpack.c.l.b16 %v261
    %v571 = vunpack.c.l.b16 %v262
    %v572 = vunpack.c.h.b16 %v262
    %v573 = vunpack.c.l.b16 %v263
    %v574 = vunpack.c.l.b16 %v264
    %v575 = vunpack.c.h.b16 %v264
    %v576 = vunpack.c.l.b16 %v265
    %v577 = vunpack.c.l.b16 %v266
    %v578 = vunpack.c.h.b16 %v266
    %v579 = vunpack.c.l.b16 %v267
    %v580 = vunpack.c.l.b16 %v268
    %v581 = vunpack.c.h.b16 %v268
    %v582 = vunpack.c.l.b16 %v269
    %v583 = vunpack.c.l.b16 %v270
    %v584 = vunpack.c.h.b16 %v270
    %v585 = vunpack.c.l.b16 %v271
    %v586 = vunpack.c.l.b16 %v272
    %v587 = vunpack.c.h.b16 %v272
    %v588 = vunpack.c.l.b16 %v273
    %v589 = vunpack.c.l.b16 %v274
    %v590 = vunpack.c.h.b16 %v274
    %v591 = vunpack.c.l.b16 %v275
    %v592 = vunpack.c.l.b16 %v276
    %v593 = vunpack.c.h.b16 %v276
    %v594 = vunpack.c.l.b16 %v277
    %v595 = vunpack.c.l.b16 %v278
    %v596 = vunpack.c.h.b16 %v278
    %v597 = vunpack.c.l.b16 %v279
    %v598 = vunpack.c.l.b16 %v280
    %v599 = vunpack.c.h.b16 %v280
    %v600 = vunpack.c.l.b16 %v281
    %v601 = vunpack.c.l.b16 %v282
    %v602 = vunpack.c.h.b16 %v282
    %v603 = vunpack.c.l.b16 %v283
    %v604 = vunpack.c.l.b16 %v284
    %v605 = vunpack.c.h.b16 %v284
    %v606 = vunpack.c.l.b16 %v285
    %v607 = vunpack.c.l.b16 %v286
    %v608 = vunpack.c.h.b16 %v286
    %v609 = vunpack.c.l.b16 %v287
    %v610 = vunpack.c.l.b16 %v288
    %v611 = vunpack.c.h.b16 %v288
    %v612 = vunpack.c.l.b16 %v289
    %v613 = vunpack.c.l.b16 %v290
    %v614 = vunpack.c.h.b16 %v290
    %v615 = vunpack.c.l.b16 %v291
    %v616 = vunpack.c.l.b16 %v292
    %v617 = vunpack.c.h.b16 %v292
    %v618 = vunpack.c.l.b16 %v293
    %v619 = vunpack.c.l.b16 %v294
    %v620 = vunpack.c.h.b16 %v294
    %v621 = vunpack.c.l.b16 %v295
    %v622 = vunpack.c.l.b16 %v296
    %v623 = vunpack.c.h.b16 %v296
    %v624 = vunpack.c.l.b16 %v297
    %v625 = vunpack.c.l.b16 %v298
    %v626 = vunpack.c.h.b16 %v298
    %v627 = vunpack.c.l.b16 %v299
    %v628 = vunpack.c.l.b16 %v300
    %v629 = vunpack.c.h.b16 %v300
    %v630 = vunpack.c.l.b16 %v301
    %v631 = vunpack.c.l.b16 %v302
    %v632 = vunpack.c.h.b16 %v302
    %v633 = vunpack.c.l.b16 %v303
    %v634 = vunpack.c.l.b16 %v304
    %v635 = vunpack.c.h.b16 %v304
    %v636 = vunpack.c.l.b16 %v305
    %v637 = vunpack.c.l.b16 %v306
    %v638 = vunpack.c.h.b16 %v306
    %v639 = vunpack.c.l.b16 %v307
    %v640 = vunpack.c.l.b16 %v308
    %v641 = vunpack.c.h.b16 %v308
    %v642 = vunpack.c.l.b16 %v309
    %v643 = vunpack.c.l.b16 %v310
    %v644 = vunpack.c.h.b16 %v310
    %v645 = vunpack.c.l.b16 %v311
    %v646 = vunpack.c.l.b16 %v312
    %v647 = vunpack.c.h.b16 %v312
    %v648 = vunpack.c.l.b16 %v313
    %v649 = vunpack.c.l.b16 %v314
    %v650 = vunpack.c.h.b16 %v314
    %v651 = vunpack.c.l.b16 %v315
    %v652 = vunpack.c.l.b16 %v316
    %v653 = vunpack.c.h.b16 %v316
    %v654 = vunpack.c.l.b16 %v317
    %v655 = vunpack.c.l.b16 %v318
    %v656 = vunpack.c.h.b16 %v318
    %v657 = vunpack.c.l.b16 %v319
    %v658 = vunpack.c.l.b16 %v320
    %v659 = vunpack.c.h.b16 %v320
    %v660 = vunpack.c.l.b16 %v321
    %v661 = vunpack.c.l.b16 %v322
    %v662 = vunpack.c.h.b16 %v322
    %v663 = vunpack.c.l.b16 %v323
    %v664 = vunpack.c.l.b16 %v324
    %v665 = vunpack.c.h.b16 %v324
    %v666 = vunpack.c.l.b16 %v325
    %v667 = vunpack.c.l.b16 %v326
    %v668 = vunpack.c.h.b16 %v326
    %v669 = vunpack.c.l.b16 %v327
    %v670 = vunpack.c.l.b16 %v328
    %v671 = vunpack.c.h.b16 %v328
    %v672 = vunpack.c.l.b16 %v329
    %v673 = vunpack.c.l.b16 %v330
    %v674 = vunpack.c.h.b16 %v330
    %v675 = vunpack.c.l.b16 %v331
    %v676 = vunpack.c.l.b16 %v332
    %v677 = vunpack.c.h.b16 %v332
    %v678 = vunpack.c.l.b16 %v333
    %v679 = vunpack.c.l.b16 %v334
    %v680 = vunpack.c.h.b16 %v334
    %v681 = vunpack.c.l.b16 %v335
    %v682 = vunpack.c.l.b16 %v336
    %v683 = vunpack.c.h.b16 %v336
    %v684 = vunpack.c.l.b16 %v337
    %v685 = vunpack.c.l.b16 %v338
    %v686 = vunpack.c.h.b16 %v338
    %v687 = vunpack.c.l.b16 %v339
    %v688 = vpack.c.b16 %v499, %v496
    %v689 = vpack.c.b16 %v500, %v497
    %v690 = vpack.c.b16 %v501, %v498
    %v691 = vpack.c.b16 %v505, %v502
    %v692 = vpack.c.b16 %v506, %v503
    %v693 = vpack.c.b16 %v507, %v504
    %v694 = vpack.c.b16 %v511, %v508
    %v695 = vpack.c.b16 %v512, %v509
    %v696 = vpack.c.b16 %v513, %v510
    %v697 = vpack.c.b16 %v517, %v514
    %v698 = vpack.c.b16 %v518, %v515
    %v699 = vpack.c.b16 %v519, %v516
    %v700 = vpack.c.b16 %v523, %v520
    %v701 = vpack.c.b16 %v524, %v521
    %v702 = vpack.c.b16 %v525, %v522
    %v703 = vpack.c.b16 %v529, %v526
    %v704 = vpack.c.b16 %v530, %v527
    %v705 = vpack.c.b16 %v531, %v528
    %v706 = vpack.c.b16 %v535, %v532
    %v707 = vpack.c.b16 %v536, %v533
    %v708 = vpack.c.b16 %v537, %v534
    %v709 = vpack.c.b16 %v541, %v538
    %v710 = vpack.c.b16 %v542, %v539
    %v711 = vpack.c.b16 %v543, %v540
    %v712 = vpack.c.b16 %v547, %v544
    %v713 = vpack.c.b16 %v548, %v545
    %v714 = vpack.c.b16 %v549, %v546
    %v715 = vpack.c.b16 %v553, %v550
    %v716 = vpack.c.b16 %v554, %v551
    %v717 = vpack.c.b16 %v555, %v552
    %v718 = vpack.c.b16 %v559, %v556
    %v719 = vpack.c.b16 %v560, %v557
    %v720 = vpack.c.b16 %v561, %v558
    %v721 = vpack.c.b16 %v565, %v562
    %v722 = vpack.c.b16 %v566, %v563
    %v723 = vpack.c.b16 %v567, %v564
    %v724 = vpack.c.b16 %v571, %v568
    %v725 = vpack.c.b16 %v572, %v569
    %v726 = vpack.c.b16 %v573, %v570
    %v727 = vpack.c.b16 %v577, %v574
    %v728 = vpack.c.b16 %v578, %v575
    %v729 = vpack.c.b16 %v579, %v576
    %v730 = vpack.c.b16 %v583, %v580
    %v731 = vpack.c.b16 %v584, %v581
    %v732 = vpack.c.b16 %v585, %v582
    %v733 = vpack.c.b16 %v589, %v586
    %v734 = vpack.c.b16 %v590, %v587
    %v735 = vpack.c.b16 %v591, %v588
    %v736 = vpack.c.b16 %v595, %v592
    %v737 = vpack.c.b16 %v596, %v593
    %v738 = vpack.c.b16 %v597, %v594
    %v739 = vpack.c.b16 %v601, %v598
    %v740 = vpack.c.b16 %v602, %v599
    %v741 = vpack.c.b16 %v603, %v600
    %v742 = vpack.c.b16 %v607, %v604
    %v743 = vpack.c.b16 %v608, %v605
    %v744 = vpack.c.b16 %v609, %v606
    %v745 = vpack.c.b16 %v613, %v610
    %v746 = vpack.c.b16 %v614, %v611
    %v747 = vpack.c.b16 %v615, %v612
    %v748 = vpack.c.b16 %v619, %v616
    %v749 = vpack.c.b16 %v620, %v617
    %v750 = vpack.c.b16 %v621, %v618
    %v751 = vpack.c.b16 %v625, %v622
    %v752 = vpack.c.b16 %v626, %v623
    %v753 = vpack.c.b16 %v627, %v624
    %v754 = vpack.c.b16 %v631, %v628
    %v755 = vpack.c.b16 %v632, %v629
    %v756 = vpack.c.b16 %v633, %v630
    %v757 = vpack.c.b16 %v637, %v634
    %v758 = vpack.c.b16 %v638, %v635
    %v759 = vpack.c.b16 %v639, %v636
    %v760 = vpack.c.b16 %v643, %v640
    %v761 = vpack.c.b16 %v644, %v641
    %v762 = vpack.c.b16 %v645, %v642
    %v763 = vpack.c.b16 %v649, %v646
    %v764 = vpack.c.b16 %v650, %v647
    %v765 = vpack.c.b16 %v651, %v648
    %v766 = vpack.c.b16 %v655, %v652
    %v767 = vpack.c.b16 %v656, %v653
    %v768 = vpack.c.b16 %v657, %v654
    %v769 = vpack.c.b16 %v661, %v658
    %v770 = vpack.c.b16 %v662, %v659
    %v771 = vpack.c.b16 %v663, %v660
    %v772 = vpack.c.b16 %v667, %v664
    %v773 = vpack.c.b16 %v668, %v665
    %v774 = vpack.c.b16 %v669, %v666
    %v775 = vpack.c.b16 %v673, %v670
    %v776 = vpack.c.b16 %v674, %v671
    %v777 = vpack.c.b16 %v675, %v672
    %v778 = vpack.c.b16 %v679, %v676
    %v779 = vpack.c.b16 %v680, %v677
    %v780 = vpack.c.b16 %v681, %v678
    %v781 = vpack.c.b16 %v685, %v682
    %v782 = vpack.c.b16 %v686, %v683
    %v783 = vpack.c.b16 %v687, %v684
    %880 = vmatpush.bf16.msra.mxu0 %v709
    %881 = vmatpush.bf16.msra.mxu0 %v706
    %882 = vmatpush.bf16.msra.mxu0 %v703
    %883 = vmatpush.bf16.msra.mxu0 %v700
    %884 = vmatpush.bf16.msra.mxu0 %v697
    %885 = vmatpush.bf16.msra.mxu0 %v694
    %886 = vmatpush.bf16.msra.mxu0 %v691
    %887 = vmatpush.bf16.msra.mxu0 %v688
    %888 = vmatmul.bf16.gmra.mxu0 %v360
    %v889 = vpop.f32.mrf.mxu0
    %v890 = vadd.f32 %v342, %v889
    %v891 = vpop.f32.mrf.mxu0
    %v892 = vadd.f32 %v342, %v891
    %893 = vdwg.mxu0
    %894 = vmatpush.bf16.msra.mxu0 %v733
    %895 = vmatpush.bf16.msra.mxu0 %v730
    %896 = vmatpush.bf16.msra.mxu0 %v727
    %897 = vmatpush.bf16.msra.mxu0 %v724
    %898 = vmatpush.bf16.msra.mxu0 %v721
    %899 = vmatpush.bf16.msra.mxu0 %v718
    %900 = vmatpush.bf16.msra.mxu0 %v715
    %901 = vmatpush.bf16.msra.mxu0 %v712
    %902 = vmatmul.bf16.gmra.mxu0 %v361
    %v903 = vpop.f32.mrf.mxu0
    %v904 = vadd.f32 %v890, %v903
    %v905 = vpop.f32.mrf.mxu0
    %v906 = vadd.f32 %v892, %v905
    %907 = vdwg.mxu0
    %908 = vmatpush.bf16.msra.mxu0 %v757
    %909 = vmatpush.bf16.msra.mxu0 %v754
    %910 = vmatpush.bf16.msra.mxu0 %v751
    %911 = vmatpush.bf16.msra.mxu0 %v748
    %912 = vmatpush.bf16.msra.mxu0 %v745
    %913 = vmatpush.bf16.msra.mxu0 %v742
    %914 = vmatpush.bf16.msra.mxu0 %v739
    %915 = vmatpush.bf16.msra.mxu0 %v736
    %916 = vmatmul.bf16.gmra.mxu0 %v362
    %v917 = vpop.f32.mrf.mxu0
    %v918 = vadd.f32 %v904, %v917
    %v919 = vpop.f32.mrf.mxu0
    %v920 = vadd.f32 %v906, %v919
    %921 = vdwg.mxu0
    %922 = vmatpush.bf16.msra.mxu0 %v781
    %923 = vmatpush.bf16.msra.mxu0 %v778
    %924 = vmatpush.bf16.msra.mxu0 %v775
    %925 = vmatpush.bf16.msra.mxu0 %v772
    %926 = vmatpush.bf16.msra.mxu0 %v769
    %927 = vmatpush.bf16.msra.mxu0 %v766
    %928 = vmatpush.bf16.msra.mxu0 %v763
    %929 = vmatpush.bf16.msra.mxu0 %v760
    %930 = vmatmul.bf16.gmra.mxu0 %v363
    %v931 = vpop.f32.mrf.mxu0
    %v932 = vadd.f32 %v918, %v931
    %v933 = vpop.f32.mrf.mxu0
    %v934 = vadd.f32 %v920, %v933
    %935 = vdwg.mxu0
    %936 = vmatpush.bf16.msra.mxu0 %v710
    %937 = vmatpush.bf16.msra.mxu0 %v707
    %938 = vmatpush.bf16.msra.mxu0 %v704
    %939 = vmatpush.bf16.msra.mxu0 %v701
    %940 = vmatpush.bf16.msra.mxu0 %v698
    %941 = vmatpush.bf16.msra.mxu0 %v695
    %942 = vmatpush.bf16.msra.mxu0 %v692
    %943 = vmatpush.bf16.msra.mxu0 %v689
    %944 = vmatmul.bf16.gmra.mxu0 %v360
    %v945 = vpop.f32.mrf.mxu0
    %v946 = vadd.f32 %v343, %v945
    %v947 = vpop.f32.mrf.mxu0
    %v948 = vadd.f32 %v343, %v947
    %949 = vdwg.mxu0
    %950 = vmatpush.bf16.msra.mxu0 %v734
    %951 = vmatpush.bf16.msra.mxu0 %v731
    %952 = vmatpush.bf16.msra.mxu0 %v728
    %953 = vmatpush.bf16.msra.mxu0 %v725
    %954 = vmatpush.bf16.msra.mxu0 %v722
    %955 = vmatpush.bf16.msra.mxu0 %v719
    %956 = vmatpush.bf16.msra.mxu0 %v716
    %957 = vmatpush.bf16.msra.mxu0 %v713
    %958 = vmatmul.bf16.gmra.mxu0 %v361
    %v959 = vpop.f32.mrf.mxu0
    %v960 = vadd.f32 %v946, %v959
    %v961 = vpop.f32.mrf.mxu0
    %v962 = vadd.f32 %v948, %v961
    %963 = vdwg.mxu0
    %964 = vmatpush.bf16.msra.mxu0 %v758
    %965 = vmatpush.bf16.msra.mxu0 %v755
    %966 = vmatpush.bf16.msra.mxu0 %v752
    %967 = vmatpush.bf16.msra.mxu0 %v749
    %968 = vmatpush.bf16.msra.mxu0 %v746
    %969 = vmatpush.bf16.msra.mxu0 %v743
    %970 = vmatpush.bf16.msra.mxu0 %v740
    %971 = vmatpush.bf16.msra.mxu0 %v737
    %972 = vmatmul.bf16.gmra.mxu0 %v362
    %v973 = vpop.f32.mrf.mxu0
    %v974 = vadd.f32 %v960, %v973
    %v975 = vpop.f32.mrf.mxu0
    %v976 = vadd.f32 %v962, %v975
    %977 = vdwg.mxu0
    %978 = vmatpush.bf16.msra.mxu0 %v782
    %979 = vmatpush.bf16.msra.mxu0 %v779
    %980 = vmatpush.bf16.msra.mxu0 %v776
    %981 = vmatpush.bf16.msra.mxu0 %v773
    %982 = vmatpush.bf16.msra.mxu0 %v770
    %983 = vmatpush.bf16.msra.mxu0 %v767
    %984 = vmatpush.bf16.msra.mxu0 %v764
    %985 = vmatpush.bf16.msra.mxu0 %v761
    %986 = vmatmul.bf16.gmra.mxu0 %v363
    %v987 = vpop.f32.mrf.mxu0
    %v988 = vadd.f32 %v974, %v987
    %v989 = vpop.f32.mrf.mxu0
    %v990 = vadd.f32 %v976, %v989
    %991 = vdwg.mxu0
    %992 = vmatpush.bf16.msra.mxu0 %v711
    %993 = vmatpush.bf16.msra.mxu0 %v708
    %994 = vmatpush.bf16.msra.mxu0 %v705
    %995 = vmatpush.bf16.msra.mxu0 %v702
    %996 = vmatpush.bf16.msra.mxu0 %v699
    %997 = vmatpush.bf16.msra.mxu0 %v696
    %998 = vmatpush.bf16.msra.mxu0 %v693
    %999 = vmatpush.bf16.msra.mxu0 %v690
    %1000 = vmatmul.bf16.gmra.mxu0 %v360
    %v1001 = vpop.f32.mrf.mxu0
    %v1002 = vadd.f32 %v344, %v1001
    %v1003 = vpop.f32.mrf.mxu0
    %v1004 = vadd.f32 %v344, %v1003
    %1005 = vdwg.mxu0
    %1006 = vmatpush.bf16.msra.mxu0 %v735
    %1007 = vmatpush.bf16.msra.mxu0 %v732
    %1008 = vmatpush.bf16.msra.mxu0 %v729
    %1009 = vmatpush.bf16.msra.mxu0 %v726
    %1010 = vmatpush.bf16.msra.mxu0 %v723
    %1011 = vmatpush.bf16.msra.mxu0 %v720
    %1012 = vmatpush.bf16.msra.mxu0 %v717
    %1013 = vmatpush.bf16.msra.mxu0 %v714
    %1014 = vmatmul.bf16.gmra.mxu0 %v361
    %v1015 = vpop.f32.mrf.mxu0
    %v1016 = vadd.f32 %v1002, %v1015
    %v1017 = vpop.f32.mrf.mxu0
    %v1018 = vadd.f32 %v1004, %v1017
    %1019 = vdwg.mxu0
    %1020 = vmatpush.bf16.msra.mxu0 %v759
    %1021 = vmatpush.bf16.msra.mxu0 %v756
    %1022 = vmatpush.bf16.msra.mxu0 %v753
    %1023 = vmatpush.bf16.msra.mxu0 %v750
    %1024 = vmatpush.bf16.msra.mxu0 %v747
    %1025 = vmatpush.bf16.msra.mxu0 %v744
    %1026 = vmatpush.bf16.msra.mxu0 %v741
    %1027 = vmatpush.bf16.msra.mxu0 %v738
    %1028 = vmatmul.bf16.gmra.mxu0 %v362
    %v1029 = vpop.f32.mrf.mxu0
    %v1030 = vadd.f32 %v1016, %v1029
    %v1031 = vpop.f32.mrf.mxu0
    %v1032 = vadd.f32 %v1018, %v1031
    %1033 = vdwg.mxu0
    %1034 = vmatpush.bf16.msra.mxu0 %v783
    %1035 = vmatpush.bf16.msra.mxu0 %v780
    %1036 = vmatpush.bf16.msra.mxu0 %v777
    %1037 = vmatpush.bf16.msra.mxu0 %v774
    %1038 = vmatpush.bf16.msra.mxu0 %v771
    %1039 = vmatpush.bf16.msra.mxu0 %v768
    %1040 = vmatpush.bf16.msra.mxu0 %v765
    %1041 = vmatpush.bf16.msra.mxu0 %v762
    %1042 = vmatmul.bf16.gmra.mxu0 %v363
    %v1043 = vpop.f32.mrf.mxu0
    %v1044 = vadd.f32 %v1030, %v1043
    %v1045 = vpop.f32.mrf.mxu0
    %v1046 = vadd.f32 %v1032, %v1045
    %1047 = vdwg.mxu0
    %v1048 = vpack.c.bf16 %v988, %v932
    %v1049 = vpack.c.bf16 %v1044, %v1044
    %v1050 = vpack.c.bf16 %v990, %v934
    %v1051 = vpack.c.bf16 %v1046, %v1046
    %v1052 = vunpack.c.l.bf16 %v1048
    %v1053 = vunpack.c.h.bf16 %v1048
    %v1054 = vunpack.c.l.bf16 %v1049
    %v1055 = vunpack.c.l.bf16 %v1050
    %v1056 = vunpack.c.h.bf16 %v1050
    %v1057 = vunpack.c.l.bf16 %v1051
    %v1058 = vmax.f32 %v1052, 0.0
    %v1059 = vmax.f32 %v1053, 0.0
    %v1060 = vmax.f32 %v1054, 0.0
    %v1061 = vmax.f32 %v1055, 0.0
    %v1062 = vmax.f32 %v1056, 0.0
    %v1063 = vmax.f32 %v1057, 0.0
    %v1064 = vpack.c.bf16 %v1061, %v1058
    %v1065 = vpack.c.bf16 %v1062, %v1059
    %v1066 = vpack.c.bf16 %v1063, %v1060
    %v1067 = vld [vmem:[#allocation5] sm:$0xff]
    %v1068 = vld [vmem:[#allocation5 + $0x8] sm:$0xf]
    %v1069 = vld [vmem:[#allocation5 + $0xc] sm:$0xff]
    %v1070 = vld [vmem:[#allocation5 + $0x14] sm:$0xf]
    %v1071 = vld [vmem:[#allocation5 + $0x18] sm:$0xff]
    %v1072 = vld [vmem:[#allocation5 + $0x20] sm:$0xf]
    %v1073 = vld [vmem:[#allocation5 + $0x24] sm:$0xff]
    %v1074 = vld [vmem:[#allocation5 + $0x2c] sm:$0xf]
    %v1075 = vld [vmem:[#allocation5 + $0x30] sm:$0xff]
    %v1076 = vld [vmem:[#allocation5 + $0x38] sm:$0xf]
    %v1077 = vld [vmem:[#allocation5 + $0x3c] sm:$0xff]
    %v1078 = vld [vmem:[#allocation5 + $0x44] sm:$0xf]
    %v1079 = vld [vmem:[#allocation5 + $0x48] sm:$0xff]
    %v1080 = vld [vmem:[#allocation5 + $0x50] sm:$0xf]
    %v1081 = vld [vmem:[#allocation5 + $0x54] sm:$0xff]
    %v1082 = vld [vmem:[#allocation5 + $0x5c] sm:$0xf]
    %v1083 = vld [vmem:[#allocation5 + $0x60] sm:$0xff]
    %v1084 = vld [vmem:[#allocation5 + $0x68] sm:$0xf]
    %v1085 = vld [vmem:[#allocation5 + $0x6c] sm:$0xff]
    %v1086 = vld [vmem:[#allocation5 + $0x74] sm:$0xf]
    %v1087 = vld [vmem:[#allocation5 + $0x78] sm:$0xff]
    %v1088 = vld [vmem:[#allocation5 + $0x80] sm:$0xf]
    %v1089 = vld [vmem:[#allocation5 + $0x84] sm:$0xff]
    %v1090 = vld [vmem:[#allocation5 + $0x8c] sm:$0xf]
    %v1091 = vld [vmem:[#allocation5 + $0x90] sm:$0xff]
    %v1092 = vld [vmem:[#allocation5 + $0x98] sm:$0xf]
    %v1093 = vld [vmem:[#allocation5 + $0x9c] sm:$0xff]
    %v1094 = vld [vmem:[#allocation5 + $0xa4] sm:$0xf]
    %v1095 = vld [vmem:[#allocation5 + $0xa8] sm:$0xff]
    %v1096 = vld [vmem:[#allocation5 + $0xb0] sm:$0xf]
    %v1097 = vld [vmem:[#allocation5 + $0xb4] sm:$0xff]
    %v1098 = vld [vmem:[#allocation5 + $0xbc] sm:$0xf]
    %v1099 = vld [vmem:[#allocation5 + $0xc0] sm:$0xff]
    %v1100 = vld [vmem:[#allocation5 + $0xc8] sm:$0xf]
    %v1101 = vld [vmem:[#allocation5 + $0xcc] sm:$0xff]
    %v1102 = vld [vmem:[#allocation5 + $0xd4] sm:$0xf]
    %v1103 = vld [vmem:[#allocation5 + $0xd8] sm:$0xff]
    %v1104 = vld [vmem:[#allocation5 + $0xe0] sm:$0xf]
    %v1105 = vld [vmem:[#allocation5 + $0xe4] sm:$0xff]
    %v1106 = vld [vmem:[#allocation5 + $0xec] sm:$0xf]
    %v1107 = vld [vmem:[#allocation5 + $0xf0] sm:$0xff]
    %v1108 = vld [vmem:[#allocation5 + $0xf8] sm:$0xf]
    %v1109 = vld [vmem:[#allocation5 + $0xfc] sm:$0xff]
    %v1110 = vld [vmem:[#allocation5 + $0x104] sm:$0xf]
    %v1111 = vld [vmem:[#allocation5 + $0x108] sm:$0xff]
    %v1112 = vld [vmem:[#allocation5 + $0x110] sm:$0xf]
    %v1113 = vld [vmem:[#allocation5 + $0x114] sm:$0xff]
    %v1114 = vld [vmem:[#allocation5 + $0x11c] sm:$0xf]
    %v1115 = vld [vmem:[#allocation5 + $0x120] sm:$0xff]
    %v1116 = vld [vmem:[#allocation5 + $0x128] sm:$0xf]
    %v1117 = vld [vmem:[#allocation5 + $0x12c] sm:$0xff]
    %v1118 = vld [vmem:[#allocation5 + $0x134] sm:$0xf]
    %v1119 = vld [vmem:[#allocation5 + $0x138] sm:$0xff]
    %v1120 = vld [vmem:[#allocation5 + $0x140] sm:$0xf]
    %v1121 = vld [vmem:[#allocation5 + $0x144] sm:$0xff]
    %v1122 = vld [vmem:[#allocation5 + $0x14c] sm:$0xf]
    %v1123 = vld [vmem:[#allocation5 + $0x150] sm:$0xff]
    %v1124 = vld [vmem:[#allocation5 + $0x158] sm:$0xf]
    %v1125 = vld [vmem:[#allocation5 + $0x15c] sm:$0xff]
    %v1126 = vld [vmem:[#allocation5 + $0x164] sm:$0xf]
    %v1127 = vld [vmem:[#allocation5 + $0x168] sm:$0xff]
    %v1128 = vld [vmem:[#allocation5 + $0x170] sm:$0xf]
    %v1129 = vld [vmem:[#allocation5 + $0x174] sm:$0xff]
    %v1130 = vld [vmem:[#allocation5 + $0x17c] sm:$0xf]
    %v1131 = vld [vmem:[#allocation5 + $0x180] sm:$0xff]
    %v1132 = vld [vmem:[#allocation5 + $0x188] sm:$0xf]
    %v1133 = vld [vmem:[#allocation5 + $0x18c] sm:$0xff]
    %v1134 = vld [vmem:[#allocation5 + $0x194] sm:$0xf]
    %v1135 = vld [vmem:[#allocation5 + $0x198] sm:$0xff]
    %v1136 = vld [vmem:[#allocation5 + $0x1a0] sm:$0xf]
    %v1137 = vld [vmem:[#allocation5 + $0x1a4] sm:$0xff]
    %v1138 = vld [vmem:[#allocation5 + $0x1ac] sm:$0xf]
    %v1139 = vld [vmem:[#allocation5 + $0x1b0] sm:$0xff]
    %v1140 = vld [vmem:[#allocation5 + $0x1b8] sm:$0xf]
    %v1141 = vld [vmem:[#allocation5 + $0x1bc] sm:$0xff]
    %v1142 = vld [vmem:[#allocation5 + $0x1c4] sm:$0xf]
    %v1143 = vld [vmem:[#allocation5 + $0x1c8] sm:$0xff]
    %v1144 = vld [vmem:[#allocation5 + $0x1d0] sm:$0xf]
    %v1145 = vld [vmem:[#allocation5 + $0x1d4] sm:$0xff]
    %v1146 = vld [vmem:[#allocation5 + $0x1dc] sm:$0xf]
    %v1147 = vld [vmem:[#allocation5 + $0x1e0] sm:$0xff]
    %v1148 = vld [vmem:[#allocation5 + $0x1e8] sm:$0xf]
    %v1149 = vld [vmem:[#allocation5 + $0x1ec] sm:$0xff]
    %v1150 = vld [vmem:[#allocation5 + $0x1f4] sm:$0xf]
    %v1151 = vld [vmem:[#allocation5 + $0x1f8] sm:$0xff]
    %v1152 = vld [vmem:[#allocation5 + $0x200] sm:$0xf]
    %v1153 = vld [vmem:[#allocation5 + $0x204] sm:$0xff]
    %v1154 = vld [vmem:[#allocation5 + $0x20c] sm:$0xf]
    %v1155 = vld [vmem:[#allocation5 + $0x210] sm:$0xff]
    %v1156 = vld [vmem:[#allocation5 + $0x218] sm:$0xf]
    %v1157 = vld [vmem:[#allocation5 + $0x21c] sm:$0xff]
    %v1158 = vld [vmem:[#allocation5 + $0x224] sm:$0xf]
    %v1159 = vld [vmem:[#allocation5 + $0x228] sm:$0xff]
    %v1160 = vld [vmem:[#allocation5 + $0x230] sm:$0xf]
    %v1161 = vld [vmem:[#allocation5 + $0x234] sm:$0xff]
    %v1162 = vld [vmem:[#allocation5 + $0x23c] sm:$0xf]
    %v1163 = vld [vmem:[%s12] sm:$0x7]
    %v1165 = vperm.slane %v1163, 0
    %v1166 = vperm.slane %v1163, 1
    %v1167 = vperm.slane %v1163, 2
    %v1267 = vunpack.c.l.b16 %v1067
    %v1268 = vunpack.c.h.b16 %v1067
    %v1269 = vunpack.c.l.b16 %v1068
    %v1270 = vunpack.c.l.b16 %v1069
    %v1271 = vunpack.c.h.b16 %v1069
    %v1272 = vunpack.c.l.b16 %v1070
    %v1273 = vunpack.c.l.b16 %v1071
    %v1274 = vunpack.c.h.b16 %v1071
    %v1275 = vunpack.c.l.b16 %v1072
    %v1276 = vunpack.c.l.b16 %v1073
    %v1277 = vunpack.c.h.b16 %v1073
    %v1278 = vunpack.c.l.b16 %v1074
    %v1279 = vunpack.c.l.b16 %v1075
    %v1280 = vunpack.c.h.b16 %v1075
    %v1281 = vunpack.c.l.b16 %v1076
    %v1282 = vunpack.c.l.b16 %v1077
    %v1283 = vunpack.c.h.b16 %v1077
    %v1284 = vunpack.c.l.b16 %v1078
    %v1285 = vunpack.c.l.b16 %v1079
    %v1286 = vunpack.c.h.b16 %v1079
    %v1287 = vunpack.c.l.b16 %v1080
    %v1288 = vunpack.c.l.b16 %v1081
    %v1289 = vunpack.c.h.b16 %v1081
    %v1290 = vunpack.c.l.b16 %v1082
    %v1291 = vunpack.c.l.b16 %v1083
    %v1292 = vunpack.c.h.b16 %v1083
    %v1293 = vunpack.c.l.b16 %v1084
    %v1294 = vunpack.c.l.b16 %v1085
    %v1295 = vunpack.c.h.b16 %v1085
    %v1296 = vunpack.c.l.b16 %v1086
    %v1297 = vunpack.c.l.b16 %v1087
    %v1298 = vunpack.c.h.b16 %v1087
    %v1299 = vunpack.c.l.b16 %v1088
    %v1300 = vunpack.c.l.b16 %v1089
    %v1301 = vunpack.c.h.b16 %v1089
    %v1302 = vunpack.c.l.b16 %v1090
    %v1303 = vunpack.c.l.b16 %v1091
    %v1304 = vunpack.c.h.b16 %v1091
    %v1305 = vunpack.c.l.b16 %v1092
    %v1306 = vunpack.c.l.b16 %v1093
    %v1307 = vunpack.c.h.b16 %v1093
    %v1308 = vunpack.c.l.b16 %v1094
    %v1309 = vunpack.c.l.b16 %v1095
    %v1310 = vunpack.c.h.b16 %v1095
    %v1311 = vunpack.c.l.b16 %v1096
    %v1312 = vunpack.c.l.b16 %v1097
    %v1313 = vunpack.c.h.b16 %v1097
    %v1314 = vunpack.c.l.b16 %v1098
    %v1315 = vunpack.c.l.b16 %v1099
    %v1316 = vunpack.c.h.b16 %v1099
    %v1317 = vunpack.c.l.b16 %v1100
    %v1318 = vunpack.c.l.b16 %v1101
    %v1319 = vunpack.c.h.b16 %v1101
    %v1320 = vunpack.c.l.b16 %v1102
    %v1321 = vunpack.c.l.b16 %v1103
    %v1322 = vunpack.c.h.b16 %v1103
    %v1323 = vunpack.c.l.b16 %v1104
    %v1324 = vunpack.c.l.b16 %v1105
    %v1325 = vunpack.c.h.b16 %v1105
    %v1326 = vunpack.c.l.b16 %v1106
    %v1327 = vunpack.c.l.b16 %v1107
    %v1328 = vunpack.c.h.b16 %v1107
    %v1329 = vunpack.c.l.b16 %v1108
    %v1330 = vunpack.c.l.b16 %v1109
    %v1331 = vunpack.c.h.b16 %v1109
    %v1332 = vunpack.c.l.b16 %v1110
    %v1333 = vunpack.c.l.b16 %v1111
    %v1334 = vunpack.c.h.b16 %v1111
    %v1335 = vunpack.c.l.b16 %v1112
    %v1336 = vunpack.c.l.b16 %v1113
    %v1337 = vunpack.c.h.b16 %v1113
    %v1338 = vunpack.c.l.b16 %v1114
    %v1339 = vunpack.c.l.b16 %v1115
    %v1340 = vunpack.c.h.b16 %v1115
    %v1341 = vunpack.c.l.b16 %v1116
    %v1342 = vunpack.c.l.b16 %v1117
    %v1343 = vunpack.c.h.b16 %v1117
    %v1344 = vunpack.c.l.b16 %v1118
    %v1345 = vunpack.c.l.b16 %v1119
    %v1346 = vunpack.c.h.b16 %v1119
    %v1347 = vunpack.c.l.b16 %v1120
    %v1348 = vunpack.c.l.b16 %v1121
    %v1349 = vunpack.c.h.b16 %v1121
    %v1350 = vunpack.c.l.b16 %v1122
    %v1351 = vunpack.c.l.b16 %v1123
    %v1352 = vunpack.c.h.b16 %v1123
    %v1353 = vunpack.c.l.b16 %v1124
    %v1354 = vunpack.c.l.b16 %v1125
    %v1355 = vunpack.c.h.b16 %v1125
    %v1356 = vunpack.c.l.b16 %v1126
    %v1357 = vunpack.c.l.b16 %v1127
    %v1358 = vunpack.c.h.b16 %v1127
    %v1359 = vunpack.c.l.b16 %v1128
    %v1360 = vunpack.c.l.b16 %v1129
    %v1361 = vunpack.c.h.b16 %v1129
    %v1362 = vunpack.c.l.b16 %v1130
    %v1363 = vunpack.c.l.b16 %v1131
    %v1364 = vunpack.c.h.b16 %v1131
    %v1365 = vunpack.c.l.b16 %v1132
    %v1366 = vunpack.c.l.b16 %v1133
    %v1367 = vunpack.c.h.b16 %v1133
    %v1368 = vunpack.c.l.b16 %v1134
    %v1369 = vunpack.c.l.b16 %v1135
    %v1370 = vunpack.c.h.b16 %v1135
    %v1371 = vunpack.c.l.b16 %v1136
    %v1372 = vunpack.c.l.b16 %v1137
    %v1373 = vunpack.c.h.b16 %v1137
    %v1374 = vunpack.c.l.b16 %v1138
    %v1375 = vunpack.c.l.b16 %v1139
    %v1376 = vunpack.c.h.b16 %v1139
    %v1377 = vunpack.c.l.b16 %v1140
    %v1378 = vunpack.c.l.b16 %v1141
    %v1379 = vunpack.c.h.b16 %v1141
    %v1380 = vunpack.c.l.b16 %v1142
    %v1381 = vunpack.c.l.b16 %v1143
    %v1382 = vunpack.c.h.b16 %v1143
    %v1383 = vunpack.c.l.b16 %v1144
    %v1384 = vunpack.c.l.b16 %v1145
    %v1385 = vunpack.c.h.b16 %v1145
    %v1386 = vunpack.c.l.b16 %v1146
    %v1387 = vunpack.c.l.b16 %v1147
    %v1388 = vunpack.c.h.b16 %v1147
    %v1389 = vunpack.c.l.b16 %v1148
    %v1390 = vunpack.c.l.b16 %v1149
    %v1391 = vunpack.c.h.b16 %v1149
    %v1392 = vunpack.c.l.b16 %v1150
    %v1393 = vunpack.c.l.b16 %v1151
    %v1394 = vunpack.c.h.b16 %v1151
    %v1395 = vunpack.c.l.b16 %v1152
    %v1396 = vunpack.c.l.b16 %v1153
    %v1397 = vunpack.c.h.b16 %v1153
    %v1398 = vunpack.c.l.b16 %v1154
    %v1399 = vunpack.c.l.b16 %v1155
    %v1400 = vunpack.c.h.b16 %v1155
    %v1401 = vunpack.c.l.b16 %v1156
    %v1402 = vunpack.c.l.b16 %v1157
    %v1403 = vunpack.c.h.b16 %v1157
    %v1404 = vunpack.c.l.b16 %v1158
    %v1405 = vunpack.c.l.b16 %v1159
    %v1406 = vunpack.c.h.b16 %v1159
    %v1407 = vunpack.c.l.b16 %v1160
    %v1408 = vunpack.c.l.b16 %v1161
    %v1409 = vunpack.c.h.b16 %v1161
    %v1410 = vunpack.c.l.b16 %v1162
    %v1411 = vpack.c.b16 %v1270, %v1267
    %v1412 = vpack.c.b16 %v1271, %v1268
    %v1413 = vpack.c.b16 %v1272, %v1269
    %v1414 = vpack.c.b16 %v1276, %v1273
    %v1415 = vpack.c.b16 %v1277, %v1274
    %v1416 = vpack.c.b16 %v1278, %v1275
    %v1417 = vpack.c.b16 %v1282, %v1279
    %v1418 = vpack.c.b16 %v1283, %v1280
    %v1419 = vpack.c.b16 %v1284, %v1281
    %v1420 = vpack.c.b16 %v1288, %v1285
    %v1421 = vpack.c.b16 %v1289, %v1286
    %v1422 = vpack.c.b16 %v1290, %v1287
    %v1423 = vpack.c.b16 %v1294, %v1291
    %v1424 = vpack.c.b16 %v1295, %v1292
    %v1425 = vpack.c.b16 %v1296, %v1293
    %v1426 = vpack.c.b16 %v1300, %v1297
    %v1427 = vpack.c.b16 %v1301, %v1298
    %v1428 = vpack.c.b16 %v1302, %v1299
    %v1429 = vpack.c.b16 %v1306, %v1303
    %v1430 = vpack.c.b16 %v1307, %v1304
    %v1431 = vpack.c.b16 %v1308, %v1305
    %v1432 = vpack.c.b16 %v1312, %v1309
    %v1433 = vpack.c.b16 %v1313, %v1310
    %v1434 = vpack.c.b16 %v1314, %v1311
    %v1435 = vpack.c.b16 %v1318, %v1315
    %v1436 = vpack.c.b16 %v1319, %v1316
    %v1437 = vpack.c.b16 %v1320, %v1317
    %v1438 = vpack.c.b16 %v1324, %v1321
    %v1439 = vpack.c.b16 %v1325, %v1322
    %v1440 = vpack.c.b16 %v1326, %v1323
    %v1441 = vpack.c.b16 %v1330, %v1327
    %v1442 = vpack.c.b16 %v1331, %v1328
    %v1443 = vpack.c.b16 %v1332, %v1329
    %v1444 = vpack.c.b16 %v1336, %v1333
    %v1445 = vpack.c.b16 %v1337, %v1334
    %v1446 = vpack.c.b16 %v1338, %v1335
    %v1447 = vpack.c.b16 %v1342, %v1339
    %v1448 = vpack.c.b16 %v1343, %v1340
    %v1449 = vpack.c.b16 %v1344, %v1341
    %v1450 = vpack.c.b16 %v1348, %v1345
    %v1451 = vpack.c.b16 %v1349, %v1346
    %v1452 = vpack.c.b16 %v1350, %v1347
    %v1453 = vpack.c.b16 %v1354, %v1351
    %v1454 = vpack.c.b16 %v1355, %v1352
    %v1455 = vpack.c.b16 %v1356, %v1353
    %v1456 = vpack.c.b16 %v1360, %v1357
    %v1457 = vpack.c.b16 %v1361, %v1358
    %v1458 = vpack.c.b16 %v1362, %v1359
    %v1459 = vpack.c.b16 %v1366, %v1363
    %v1460 = vpack.c.b16 %v1367, %v1364
    %v1461 = vpack.c.b16 %v1368, %v1365
    %v1462 = vpack.c.b16 %v1372, %v1369
    %v1463 = vpack.c.b16 %v1373, %v1370
    %v1464 = vpack.c.b16 %v1374, %v1371
    %v1465 = vpack.c.b16 %v1378, %v1375
    %v1466 = vpack.c.b16 %v1379, %v1376
    %v1467 = vpack.c.b16 %v1380, %v1377
    %v1468 = vpack.c.b16 %v1384, %v1381
    %v1469 = vpack.c.b16 %v1385, %v1382
    %v1470 = vpack.c.b16 %v1386, %v1383
    %v1471 = vpack.c.b16 %v1390, %v1387
    %v1472 = vpack.c.b16 %v1391, %v1388
    %v1473 = vpack.c.b16 %v1392, %v1389
    %v1474 = vpack.c.b16 %v1396, %v1393
    %v1475 = vpack.c.b16 %v1397, %v1394
    %v1476 = vpack.c.b16 %v1398, %v1395
    %v1477 = vpack.c.b16 %v1402, %v1399
    %v1478 = vpack.c.b16 %v1403, %v1400
    %v1479 = vpack.c.b16 %v1404, %v1401
    %v1480 = vpack.c.b16 %v1408, %v1405
    %v1481 = vpack.c.b16 %v1409, %v1406
    %v1482 = vpack.c.b16 %v1410, %v1407
    %1555 = vmatpush.bf16.msra.mxu0 %v1432
    %1556 = vmatpush.bf16.msra.mxu0 %v1429
    %1557 = vmatpush.bf16.msra.mxu0 %v1426
    %1558 = vmatpush.bf16.msra.mxu0 %v1423
    %1559 = vmatpush.bf16.msra.mxu0 %v1420
    %1560 = vmatpush.bf16.msra.mxu0 %v1417
    %1561 = vmatpush.bf16.msra.mxu0 %v1414
    %1562 = vmatpush.bf16.msra.mxu0 %v1411
    %1563 = vmatmul.bf16.gmra.mxu0 %v1064
    %v1564 = vpop.f32.mrf.mxu0
    %v1565 = vadd.f32 %v1165, %v1564
    %v1566 = vpop.f32.mrf.mxu0
    %v1567 = vadd.f32 %v1165, %v1566
    %1568 = vdwg.mxu0
    %1569 = vmatpush.bf16.msra.mxu0 %v1456
    %1570 = vmatpush.bf16.msra.mxu0 %v1453
    %1571 = vmatpush.bf16.msra.mxu0 %v1450
    %1572 = vmatpush.bf16.msra.mxu0 %v1447
    %1573 = vmatpush.bf16.msra.mxu0 %v1444
    %1574 = vmatpush.bf16.msra.mxu0 %v1441
    %1575 = vmatpush.bf16.msra.mxu0 %v1438
    %1576 = vmatpush.bf16.msra.mxu0 %v1435
    %1577 = vmatmul.bf16.gmra.mxu0 %v1065
    %v1578 = vpop.f32.mrf.mxu0
    %v1579 = vadd.f32 %v1565, %v1578
    %v1580 = vpop.f32.mrf.mxu0
    %v1581 = vadd.f32 %v1567, %v1580
    %1582 = vdwg.mxu0
    %1583 = vmatpush.bf16.msra.mxu0 %v1480
    %1584 = vmatpush.bf16.msra.mxu0 %v1477
    %1585 = vmatpush.bf16.msra.mxu0 %v1474
    %1586 = vmatpush.bf16.msra.mxu0 %v1471
    %1587 = vmatpush.bf16.msra.mxu0 %v1468
    %1588 = vmatpush.bf16.msra.mxu0 %v1465
    %1589 = vmatpush.bf16.msra.mxu0 %v1462
    %1590 = vmatpush.bf16.msra.mxu0 %v1459
    %1591 = vmatmul.bf16.gmra.mxu0 %v1066
    %v1592 = vpop.f32.mrf.mxu0
    %v1593 = vadd.f32 %v1579, %v1592
    %v1594 = vpop.f32.mrf.mxu0
    %v1595 = vadd.f32 %v1581, %v1594
    %1596 = vdwg.mxu0
    %1597 = vmatpush.bf16.msra.mxu0 %v1433
    %1598 = vmatpush.bf16.msra.mxu0 %v1430
    %1599 = vmatpush.bf16.msra.mxu0 %v1427
    %1600 = vmatpush.bf16.msra.mxu0 %v1424
    %1601 = vmatpush.bf16.msra.mxu0 %v1421
    %1602 = vmatpush.bf16.msra.mxu0 %v1418
    %1603 = vmatpush.bf16.msra.mxu0 %v1415
    %1604 = vmatpush.bf16.msra.mxu0 %v1412
    %1605 = vmatmul.bf16.gmra.mxu0 %v1064
    %v1606 = vpop.f32.mrf.mxu0
    %v1607 = vadd.f32 %v1166, %v1606
    %v1608 = vpop.f32.mrf.mxu0
    %v1609 = vadd.f32 %v1166, %v1608
    %1610 = vdwg.mxu0
    %1611 = vmatpush.bf16.msra.mxu0 %v1457
    %1612 = vmatpush.bf16.msra.mxu0 %v1454
    %1613 = vmatpush.bf16.msra.mxu0 %v1451
    %1614 = vmatpush.bf16.msra.mxu0 %v1448
    %1615 = vmatpush.bf16.msra.mxu0 %v1445
    %1616 = vmatpush.bf16.msra.mxu0 %v1442
    %1617 = vmatpush.bf16.msra.mxu0 %v1439
    %1618 = vmatpush.bf16.msra.mxu0 %v1436
    %1619 = vmatmul.bf16.gmra.mxu0 %v1065
    %v1620 = vpop.f32.mrf.mxu0
    %v1621 = vadd.f32 %v1607, %v1620
    %v1622 = vpop.f32.mrf.mxu0
    %v1623 = vadd.f32 %v1609, %v1622
    %1624 = vdwg.mxu0
    %1625 = vmatpush.bf16.msra.mxu0 %v1481
    %1626 = vmatpush.bf16.msra.mxu0 %v1478
    %1627 = vmatpush.bf16.msra.mxu0 %v1475
    %1628 = vmatpush.bf16.msra.mxu0 %v1472
    %1629 = vmatpush.bf16.msra.mxu0 %v1469
    %1630 = vmatpush.bf16.msra.mxu0 %v1466
    %1631 = vmatpush.bf16.msra.mxu0 %v1463
    %1632 = vmatpush.bf16.msra.mxu0 %v1460
    %1633 = vmatmul.bf16.gmra.mxu0 %v1066
    %v1634 = vpop.f32.mrf.mxu0
    %v1635 = vadd.f32 %v1621, %v1634
    %v1636 = vpop.f32.mrf.mxu0
    %v1637 = vadd.f32 %v1623, %v1636
    %1638 = vdwg.mxu0
    %1639 = vmatpush.bf16.msra.mxu0 %v1434
    %1640 = vmatpush.bf16.msra.mxu0 %v1431
    %1641 = vmatpush.bf16.msra.mxu0 %v1428
    %1642 = vmatpush.bf16.msra.mxu0 %v1425
    %1643 = vmatpush.bf16.msra.mxu0 %v1422
    %1644 = vmatpush.bf16.msra.mxu0 %v1419
    %1645 = vmatpush.bf16.msra.mxu0 %v1416
    %1646 = vmatpush.bf16.msra.mxu0 %v1413
    %1647 = vmatmul.bf16.gmra.mxu0 %v1064
    %v1648 = vpop.f32.mrf.mxu0
    %v1649 = vadd.f32 %v1167, %v1648
    %v1650 = vpop.f32.mrf.mxu0
    %v1651 = vadd.f32 %v1167, %v1650
    %1652 = vdwg.mxu0
    %1653 = vmatpush.bf16.msra.mxu0 %v1458
    %1654 = vmatpush.bf16.msra.mxu0 %v1455
    %1655 = vmatpush.bf16.msra.mxu0 %v1452
    %1656 = vmatpush.bf16.msra.mxu0 %v1449
    %1657 = vmatpush.bf16.msra.mxu0 %v1446
    %1658 = vmatpush.bf16.msra.mxu0 %v1443
    %1659 = vmatpush.bf16.msra.mxu0 %v1440
    %1660 = vmatpush.bf16.msra.mxu0 %v1437
    %1661 = vmatmul.bf16.gmra.mxu0 %v1065
    %v1662 = vpop.f32.mrf.mxu0
    %v1663 = vadd.f32 %v1649, %v1662
    %v1664 = vpop.f32.mrf.mxu0
    %v1665 = vadd.f32 %v1651, %v1664
    %1666 = vdwg.mxu0
    %1667 = vmatpush.bf16.msra.mxu0 %v1482
    %1668 = vmatpush.bf16.msra.mxu0 %v1479
    %1669 = vmatpush.bf16.msra.mxu0 %v1476
    %1670 = vmatpush.bf16.msra.mxu0 %v1473
    %1671 = vmatpush.bf16.msra.mxu0 %v1470
    %1672 = vmatpush.bf16.msra.mxu0 %v1467
    %1673 = vmatpush.bf16.msra.mxu0 %v1464
    %1674 = vmatpush.bf16.msra.mxu0 %v1461
    %1675 = vmatmul.bf16.gmra.mxu0 %v1066
    %v1676 = vpop.f32.mrf.mxu0
    %v1677 = vadd.f32 %v1663, %v1676
    %v1678 = vpop.f32.mrf.mxu0
    %v1679 = vadd.f32 %v1665, %v1678
    %1680 = vdwg.mxu0
    %v1681 = vpack.c.bf16 %v1635, %v1593
    %v1682 = vpack.c.bf16 %v1677, %v1677
    %v1683 = vpack.c.bf16 %v1637, %v1595
    %v1684 = vpack.c.bf16 %v1679, %v1679
    %v1685 = vunpack.c.l.bf16 %v1681
    %v1686 = vunpack.c.h.bf16 %v1681
    %v1687 = vunpack.c.l.bf16 %v1682
    %v1688 = vunpack.c.l.bf16 %v1683
    %v1689 = vunpack.c.h.bf16 %v1683
    %v1690 = vunpack.c.l.bf16 %v1684
    %v1691 = vmax.f32 %v1685, 0.0
    %v1692 = vmax.f32 %v1686, 0.0
    %v1693 = vmax.f32 %v1687, 0.0
    %v1694 = vmax.f32 %v1688, 0.0
    %v1695 = vmax.f32 %v1689, 0.0
    %v1696 = vmax.f32 %v1690, 0.0
    %v1697 = vpack.c.bf16 %v1694, %v1691
    %v1698 = vpack.c.bf16 %v1695, %v1692
    %v1699 = vpack.c.bf16 %v1696, %v1693
    %v1700 = vld [vmem:[#allocation7] sm:$0xff]
    %v1701 = vld [vmem:[#allocation7 + $0x8] sm:$0xff]
    %v1702 = vld [vmem:[#allocation7 + $0x10] sm:$0xff]
    %v1703 = vld [vmem:[#allocation7 + $0x18] sm:$0xff]
    %v1704 = vld [vmem:[#allocation7 + $0x20] sm:$0xff]
    %v1705 = vld [vmem:[#allocation7 + $0x28] sm:$0xff]
    %v1706 = vld [vmem:[#allocation7 + $0x30] sm:$0xff]
    %v1707 = vld [vmem:[#allocation7 + $0x38] sm:$0xff]
    %v1708 = vld [vmem:[#allocation7 + $0x40] sm:$0xff]
    %v1709 = vld [vmem:[#allocation7 + $0x48] sm:$0xff]
    %v1710 = vld [vmem:[#allocation7 + $0x50] sm:$0xff]
    %v1711 = vld [vmem:[#allocation7 + $0x58] sm:$0xff]
    %v1712 = vld [vmem:[#allocation7 + $0x60] sm:$0xff]
    %v1713 = vld [vmem:[#allocation7 + $0x68] sm:$0xff]
    %v1714 = vld [vmem:[#allocation7 + $0x70] sm:$0xff]
    %v1715 = vld [vmem:[#allocation7 + $0x78] sm:$0xff]
    %v1716 = vld [vmem:[#allocation7 + $0x80] sm:$0xff]
    %v1717 = vld [vmem:[#allocation7 + $0x88] sm:$0xff]
    %v1718 = vld [vmem:[#allocation7 + $0x90] sm:$0xff]
    %v1719 = vld [vmem:[#allocation7 + $0x98] sm:$0xff]
    %v1720 = vld [vmem:[#allocation7 + $0xa0] sm:$0xff]
    %v1721 = vld [vmem:[#allocation7 + $0xa8] sm:$0xff]
    %v1722 = vld [vmem:[#allocation7 + $0xb0] sm:$0xff]
    %v1723 = vld [vmem:[#allocation7 + $0xb8] sm:$0xff]
    %v1724 = vld [vmem:[#allocation7 + $0xc0] sm:$0xff]
    %v1725 = vld [vmem:[#allocation7 + $0xc8] sm:$0xff]
    %v1726 = vld [vmem:[#allocation7 + $0xd0] sm:$0xff]
    %v1727 = vld [vmem:[#allocation7 + $0xd8] sm:$0xff]
    %v1728 = vld [vmem:[#allocation7 + $0xe0] sm:$0xff]
    %v1729 = vld [vmem:[#allocation7 + $0xe8] sm:$0xff]
    %v1730 = vld [vmem:[#allocation7 + $0xf0] sm:$0xff]
    %v1731 = vld [vmem:[#allocation7 + $0xf8] sm:$0xff]
    %v1732 = vld [vmem:[#allocation7 + $0x100] sm:$0xff]
    %v1733 = vld [vmem:[#allocation7 + $0x108] sm:$0xff]
    %v1734 = vld [vmem:[#allocation7 + $0x110] sm:$0xff]
    %v1735 = vld [vmem:[#allocation7 + $0x118] sm:$0xff]
    %v1736 = vld [vmem:[#allocation7 + $0x120] sm:$0xff]
    %v1737 = vld [vmem:[#allocation7 + $0x128] sm:$0xff]
    %v1738 = vld [vmem:[#allocation7 + $0x130] sm:$0xff]
    %v1739 = vld [vmem:[#allocation7 + $0x138] sm:$0xff]
    %v1740 = vld [vmem:[#allocation7 + $0x140] sm:$0xff]
    %v1741 = vld [vmem:[#allocation7 + $0x148] sm:$0xff]
    %v1742 = vld [vmem:[#allocation7 + $0x150] sm:$0xff]
    %v1743 = vld [vmem:[#allocation7 + $0x158] sm:$0xff]
    %v1744 = vld [vmem:[#allocation7 + $0x160] sm:$0xff]
    %v1745 = vld [vmem:[#allocation7 + $0x168] sm:$0xff]
    %v1746 = vld [vmem:[#allocation7 + $0x170] sm:$0xff]
    %v1747 = vld [vmem:[#allocation7 + $0x178] sm:$0xff]
    %v1748 = vld [vmem:[%s13] sm:$0x3]
    %v1750 = vperm.slane %v1748, 0
    %v1751 = vperm.slane %v1748, 1
    %v1802 = vunpack.c.l.b16 %v1700
    %v1803 = vunpack.c.h.b16 %v1700
    %v1804 = vunpack.c.l.b16 %v1701
    %v1805 = vunpack.c.h.b16 %v1701
    %v1806 = vunpack.c.l.b16 %v1702
    %v1807 = vunpack.c.h.b16 %v1702
    %v1808 = vunpack.c.l.b16 %v1703
    %v1809 = vunpack.c.h.b16 %v1703
    %v1810 = vunpack.c.l.b16 %v1704
    %v1811 = vunpack.c.h.b16 %v1704
    %v1812 = vunpack.c.l.b16 %v1705
    %v1813 = vunpack.c.h.b16 %v1705
    %v1814 = vunpack.c.l.b16 %v1706
    %v1815 = vunpack.c.h.b16 %v1706
    %v1816 = vunpack.c.l.b16 %v1707
    %v1817 = vunpack.c.h.b16 %v1707
    %v1818 = vunpack.c.l.b16 %v1708
    %v1819 = vunpack.c.h.b16 %v1708
    %v1820 = vunpack.c.l.b16 %v1709
    %v1821 = vunpack.c.h.b16 %v1709
    %v1822 = vunpack.c.l.b16 %v1710
    %v1823 = vunpack.c.h.b16 %v1710
    %v1824 = vunpack.c.l.b16 %v1711
    %v1825 = vunpack.c.h.b16 %v1711
    %v1826 = vunpack.c.l.b16 %v1712
    %v1827 = vunpack.c.h.b16 %v1712
    %v1828 = vunpack.c.l.b16 %v1713
    %v1829 = vunpack.c.h.b16 %v1713
    %v1830 = vunpack.c.l.b16 %v1714
    %v1831 = vunpack.c.h.b16 %v1714
    %v1832 = vunpack.c.l.b16 %v1715
    %v1833 = vunpack.c.h.b16 %v1715
    %v1834 = vunpack.c.l.b16 %v1716
    %v1835 = vunpack.c.h.b16 %v1716
    %v1836 = vunpack.c.l.b16 %v1717
    %v1837 = vunpack.c.h.b16 %v1717
    %v1838 = vunpack.c.l.b16 %v1718
    %v1839 = vunpack.c.h.b16 %v1718
    %v1840 = vunpack.c.l.b16 %v1719
    %v1841 = vunpack.c.h.b16 %v1719
    %v1842 = vunpack.c.l.b16 %v1720
    %v1843 = vunpack.c.h.b16 %v1720
    %v1844 = vunpack.c.l.b16 %v1721
    %v1845 = vunpack.c.h.b16 %v1721
    %v1846 = vunpack.c.l.b16 %v1722
    %v1847 = vunpack.c.h.b16 %v1722
    %v1848 = vunpack.c.l.b16 %v1723
    %v1849 = vunpack.c.h.b16 %v1723
    %v1850 = vunpack.c.l.b16 %v1724
    %v1851 = vunpack.c.h.b16 %v1724
    %v1852 = vunpack.c.l.b16 %v1725
    %v1853 = vunpack.c.h.b16 %v1725
    %v1854 = vunpack.c.l.b16 %v1726
    %v1855 = vunpack.c.h.b16 %v1726
    %v1856 = vunpack.c.l.b16 %v1727
    %v1857 = vunpack.c.h.b16 %v1727
    %v1858 = vunpack.c.l.b16 %v1728
    %v1859 = vunpack.c.h.b16 %v1728
    %v1860 = vunpack.c.l.b16 %v1729
    %v1861 = vunpack.c.h.b16 %v1729
    %v1862 = vunpack.c.l.b16 %v1730
    %v1863 = vunpack.c.h.b16 %v1730
    %v1864 = vunpack.c.l.b16 %v1731
    %v1865 = vunpack.c.h.b16 %v1731
    %v1866 = vunpack.c.l.b16 %v1732
    %v1867 = vunpack.c.h.b16 %v1732
    %v1868 = vunpack.c.l.b16 %v1733
    %v1869 = vunpack.c.h.b16 %v1733
    %v1870 = vunpack.c.l.b16 %v1734
    %v1871 = vunpack.c.h.b16 %v1734
    %v1872 = vunpack.c.l.b16 %v1735
    %v1873 = vunpack.c.h.b16 %v1735
    %v1874 = vunpack.c.l.b16 %v1736
    %v1875 = vunpack.c.h.b16 %v1736
    %v1876 = vunpack.c.l.b16 %v1737
    %v1877 = vunpack.c.h.b16 %v1737
    %v1878 = vunpack.c.l.b16 %v1738
    %v1879 = vunpack.c.h.b16 %v1738
    %v1880 = vunpack.c.l.b16 %v1739
    %v1881 = vunpack.c.h.b16 %v1739
    %v1882 = vunpack.c.l.b16 %v1740
    %v1883 = vunpack.c.h.b16 %v1740
    %v1884 = vunpack.c.l.b16 %v1741
    %v1885 = vunpack.c.h.b16 %v1741
    %v1886 = vunpack.c.l.b16 %v1742
    %v1887 = vunpack.c.h.b16 %v1742
    %v1888 = vunpack.c.l.b16 %v1743
    %v1889 = vunpack.c.h.b16 %v1743
    %v1890 = vunpack.c.l.b16 %v1744
    %v1891 = vunpack.c.h.b16 %v1744
    %v1892 = vunpack.c.l.b16 %v1745
    %v1893 = vunpack.c.h.b16 %v1745
    %v1894 = vunpack.c.l.b16 %v1746
    %v1895 = vunpack.c.h.b16 %v1746
    %v1896 = vunpack.c.l.b16 %v1747
    %v1897 = vunpack.c.h.b16 %v1747
    %v1898 = vpack.c.b16 %v1804, %v1802
    %v1899 = vpack.c.b16 %v1805, %v1803
    %v1900 = vpack.c.b16 %v1808, %v1806
    %v1901 = vpack.c.b16 %v1809, %v1807
    %v1902 = vpack.c.b16 %v1812, %v1810
    %v1903 = vpack.c.b16 %v1813, %v1811
    %v1904 = vpack.c.b16 %v1816, %v1814
    %v1905 = vpack.c.b16 %v1817, %v1815
    %v1906 = vpack.c.b16 %v1820, %v1818
    %v1907 = vpack.c.b16 %v1821, %v1819
    %v1908 = vpack.c.b16 %v1824, %v1822
    %v1909 = vpack.c.b16 %v1825, %v1823
    %v1910 = vpack.c.b16 %v1828, %v1826
    %v1911 = vpack.c.b16 %v1829, %v1827
    %v1912 = vpack.c.b16 %v1832, %v1830
    %v1913 = vpack.c.b16 %v1833, %v1831
    %v1914 = vpack.c.b16 %v1836, %v1834
    %v1915 = vpack.c.b16 %v1837, %v1835
    %v1916 = vpack.c.b16 %v1840, %v1838
    %v1917 = vpack.c.b16 %v1841, %v1839
    %v1918 = vpack.c.b16 %v1844, %v1842
    %v1919 = vpack.c.b16 %v1845, %v1843
    %v1920 = vpack.c.b16 %v1848, %v1846
    %v1921 = vpack.c.b16 %v1849, %v1847
    %v1922 = vpack.c.b16 %v1852, %v1850
    %v1923 = vpack.c.b16 %v1853, %v1851
    %v1924 = vpack.c.b16 %v1856, %v1854
    %v1925 = vpack.c.b16 %v1857, %v1855
    %v1926 = vpack.c.b16 %v1860, %v1858
    %v1927 = vpack.c.b16 %v1861, %v1859
    %v1928 = vpack.c.b16 %v1864, %v1862
    %v1929 = vpack.c.b16 %v1865, %v1863
    %v1930 = vpack.c.b16 %v1868, %v1866
    %v1931 = vpack.c.b16 %v1869, %v1867
    %v1932 = vpack.c.b16 %v1872, %v1870
    %v1933 = vpack.c.b16 %v1873, %v1871
    %v1934 = vpack.c.b16 %v1876, %v1874
    %v1935 = vpack.c.b16 %v1877, %v1875
    %v1936 = vpack.c.b16 %v1880, %v1878
    %v1937 = vpack.c.b16 %v1881, %v1879
    %v1938 = vpack.c.b16 %v1884, %v1882
    %v1939 = vpack.c.b16 %v1885, %v1883
    %v1940 = vpack.c.b16 %v1888, %v1886
    %v1941 = vpack.c.b16 %v1889, %v1887
    %v1942 = vpack.c.b16 %v1892, %v1890
    %v1943 = vpack.c.b16 %v1893, %v1891
    %v1944 = vpack.c.b16 %v1896, %v1894
    %v1945 = vpack.c.b16 %v1897, %v1895
    %1994 = vmatpush.bf16.msra.mxu0 %v1912
    %1995 = vmatpush.bf16.msra.mxu0 %v1910
    %1996 = vmatpush.bf16.msra.mxu0 %v1908
    %1997 = vmatpush.bf16.msra.mxu0 %v1906
    %1998 = vmatpush.bf16.msra.mxu0 %v1904
    %1999 = vmatpush.bf16.msra.mxu0 %v1902
    %2000 = vmatpush.bf16.msra.mxu0 %v1900
    %2001 = vmatpush.bf16.msra.mxu0 %v1898
    %2002 = vmatmul.bf16.gmra.mxu0 %v1697
    %v2003 = vpop.f32.mrf.mxu0
    %v2004 = vadd.f32 %v1750, %v2003
    %v2005 = vpop.f32.mrf.mxu0
    %v2006 = vadd.f32 %v1750, %v2005
    %2007 = vdwg.mxu0
    %2008 = vmatpush.bf16.msra.mxu0 %v1928
    %2009 = vmatpush.bf16.msra.mxu0 %v1926
    %2010 = vmatpush.bf16.msra.mxu0 %v1924
    %2011 = vmatpush.bf16.msra.mxu0 %v1922
    %2012 = vmatpush.bf16.msra.mxu0 %v1920
    %2013 = vmatpush.bf16.msra.mxu0 %v1918
    %2014 = vmatpush.bf16.msra.mxu0 %v1916
    %2015 = vmatpush.bf16.msra.mxu0 %v1914
    %2016 = vmatmul.bf16.gmra.mxu0 %v1698
    %v2017 = vpop.f32.mrf.mxu0
    %v2018 = vadd.f32 %v2004, %v2017
    %v2019 = vpop.f32.mrf.mxu0
    %v2020 = vadd.f32 %v2006, %v2019
    %2021 = vdwg.mxu0
    %2022 = vmatpush.bf16.msra.mxu0 %v1944
    %2023 = vmatpush.bf16.msra.mxu0 %v1942
    %2024 = vmatpush.bf16.msra.mxu0 %v1940
    %2025 = vmatpush.bf16.msra.mxu0 %v1938
    %2026 = vmatpush.bf16.msra.mxu0 %v1936
    %2027 = vmatpush.bf16.msra.mxu0 %v1934
    %2028 = vmatpush.bf16.msra.mxu0 %v1932
    %2029 = vmatpush.bf16.msra.mxu0 %v1930
    %2030 = vmatmul.bf16.gmra.mxu0 %v1699
    %v2031 = vpop.f32.mrf.mxu0
    %v2032 = vadd.f32 %v2018, %v2031
    %v2033 = vpop.f32.mrf.mxu0
    %v2034 = vadd.f32 %v2020, %v2033
    %2035 = vdwg.mxu0
    %2036 = vmatpush.bf16.msra.mxu0 %v1913
    %2037 = vmatpush.bf16.msra.mxu0 %v1911
    %2038 = vmatpush.bf16.msra.mxu0 %v1909
    %2039 = vmatpush.bf16.msra.mxu0 %v1907
    %2040 = vmatpush.bf16.msra.mxu0 %v1905
    %2041 = vmatpush.bf16.msra.mxu0 %v1903
    %2042 = vmatpush.bf16.msra.mxu0 %v1901
    %2043 = vmatpush.bf16.msra.mxu0 %v1899
    %2044 = vmatmul.bf16.gmra.mxu0 %v1697
    %v2045 = vpop.f32.mrf.mxu0
    %v2046 = vadd.f32 %v1751, %v2045
    %v2047 = vpop.f32.mrf.mxu0
    %v2048 = vadd.f32 %v1751, %v2047
    %2049 = vdwg.mxu0
    %2050 = vmatpush.bf16.msra.mxu0 %v1929
    %2051 = vmatpush.bf16.msra.mxu0 %v1927
    %2052 = vmatpush.bf16.msra.mxu0 %v1925
    %2053 = vmatpush.bf16.msra.mxu0 %v1923
    %2054 = vmatpush.bf16.msra.mxu0 %v1921
    %2055 = vmatpush.bf16.msra.mxu0 %v1919
    %2056 = vmatpush.bf16.msra.mxu0 %v1917
    %2057 = vmatpush.bf16.msra.mxu0 %v1915
    %2058 = vmatmul.bf16.gmra.mxu0 %v1698
    %v2059 = vpop.f32.mrf.mxu0
    %v2060 = vadd.f32 %v2046, %v2059
    %v2061 = vpop.f32.mrf.mxu0
    %v2062 = vadd.f32 %v2048, %v2061
    %2063 = vdwg.mxu0
    %2064 = vmatpush.bf16.msra.mxu0 %v1945
    %2065 = vmatpush.bf16.msra.mxu0 %v1943
    %2066 = vmatpush.bf16.msra.mxu0 %v1941
    %2067 = vmatpush.bf16.msra.mxu0 %v1939
    %2068 = vmatpush.bf16.msra.mxu0 %v1937
    %2069 = vmatpush.bf16.msra.mxu0 %v1935
    %2070 = vmatpush.bf16.msra.mxu0 %v1933
    %2071 = vmatpush.bf16.msra.mxu0 %v1931
    %2072 = vmatmul.bf16.gmra.mxu0 %v1699
    %v2073 = vpop.f32.mrf.mxu0
    %v2074 = vadd.f32 %v2060, %v2073
    %v2075 = vpop.f32.mrf.mxu0
    %v2076 = vadd.f32 %v2062, %v2075
    %2077 = vdwg.mxu0
    %v2078 = vpack.c.bf16 %v2074, %v2032
    %v2079 = vpack.c.bf16 %v2076, %v2034
    %v2080 = vunpack.c.l.bf16 %v2078
    %v2081 = vunpack.c.h.bf16 %v2078
    %v2082 = vunpack.c.l.bf16 %v2079
    %v2083 = vunpack.c.h.bf16 %v2079
    %v2084 = vmax.f32 %v2080, 0.0
    %v2085 = vmax.f32 %v2081, 0.0
    %v2086 = vmax.f32 %v2082, 0.0
    %v2087 = vmax.f32 %v2083, 0.0
    %v2088 = vpack.c.bf16 %v2086, %v2084
    %v2089 = vpack.c.bf16 %v2087, %v2085
    %v2090 = vld [vmem:[#allocation8] sm:$0xff]
    %v2091 = vld [vmem:[#allocation8 + $0x8] sm:$0xff]
    %v2092 = vld [vmem:[#allocation8 + $0x10] sm:$0xff]
    %v2093 = vld [vmem:[#allocation8 + $0x18] sm:$0xff]
    %v2094 = vld [vmem:[#allocation8 + $0x20] sm:$0xff]
    %v2095 = vld [vmem:[#allocation8 + $0x28] sm:$0xff]
    %v2096 = vld [vmem:[#allocation8 + $0x30] sm:$0xff]
    %v2097 = vld [vmem:[#allocation8 + $0x38] sm:$0xff]
    %v2098 = vld [vmem:[#allocation8 + $0x40] sm:$0xff]
    %v2099 = vld [vmem:[#allocation8 + $0x48] sm:$0xff]
    %v2100 = vld [vmem:[#allocation8 + $0x50] sm:$0xff]
    %v2101 = vld [vmem:[#allocation8 + $0x58] sm:$0xff]
    %v2102 = vld [vmem:[#allocation8 + $0x60] sm:$0xff]
    %v2103 = vld [vmem:[#allocation8 + $0x68] sm:$0xff]
    %v2104 = vld [vmem:[#allocation8 + $0x70] sm:$0xff]
    %v2105 = vld [vmem:[#allocation8 + $0x78] sm:$0xff]
    %v2106 = vld [vmem:[#allocation8 + $0x80] sm:$0xff]
    %v2107 = vld [vmem:[#allocation8 + $0x88] sm:$0xff]
    %v2108 = vld [vmem:[#allocation8 + $0x90] sm:$0xff]
    %v2109 = vld [vmem:[#allocation8 + $0x98] sm:$0xff]
    %v2110 = vld [vmem:[#allocation8 + $0xa0] sm:$0xff]
    %v2111 = vld [vmem:[#allocation8 + $0xa8] sm:$0xff]
    %v2112 = vld [vmem:[#allocation8 + $0xb0] sm:$0xff]
    %v2113 = vld [vmem:[#allocation8 + $0xb8] sm:$0xff]
    %v2114 = vld [vmem:[#allocation8 + $0xc0] sm:$0xff]
    %v2115 = vld [vmem:[#allocation8 + $0xc8] sm:$0xff]
    %v2116 = vld [vmem:[#allocation8 + $0xd0] sm:$0xff]
    %v2117 = vld [vmem:[#allocation8 + $0xd8] sm:$0xff]
    %v2118 = vld [vmem:[#allocation8 + $0xe0] sm:$0xff]
    %v2119 = vld [vmem:[#allocation8 + $0xe8] sm:$0xff]
    %v2120 = vld [vmem:[#allocation8 + $0xf0] sm:$0xff]
    %v2121 = vld [vmem:[#allocation8 + $0xf8] sm:$0xff]
    %v2122 = vld [vmem:[%s14] sm:$0x3]
    %v2124 = vperm.slane %v2122, 0
    %v2125 = vperm.slane %v2122, 1
    %v2160 = vunpack.c.l.b16 %v2090
    %v2161 = vunpack.c.h.b16 %v2090
    %v2162 = vunpack.c.l.b16 %v2091
    %v2163 = vunpack.c.h.b16 %v2091
    %v2164 = vunpack.c.l.b16 %v2092
    %v2165 = vunpack.c.h.b16 %v2092
    %v2166 = vunpack.c.l.b16 %v2093
    %v2167 = vunpack.c.h.b16 %v2093
    %v2168 = vunpack.c.l.b16 %v2094
    %v2169 = vunpack.c.h.b16 %v2094
    %v2170 = vunpack.c.l.b16 %v2095
    %v2171 = vunpack.c.h.b16 %v2095
    %v2172 = vunpack.c.l.b16 %v2096
    %v2173 = vunpack.c.h.b16 %v2096
    %v2174 = vunpack.c.l.b16 %v2097
    %v2175 = vunpack.c.h.b16 %v2097
    %v2176 = vunpack.c.l.b16 %v2098
    %v2177 = vunpack.c.h.b16 %v2098
    %v2178 = vunpack.c.l.b16 %v2099
    %v2179 = vunpack.c.h.b16 %v2099
    %v2180 = vunpack.c.l.b16 %v2100
    %v2181 = vunpack.c.h.b16 %v2100
    %v2182 = vunpack.c.l.b16 %v2101
    %v2183 = vunpack.c.h.b16 %v2101
    %v2184 = vunpack.c.l.b16 %v2102
    %v2185 = vunpack.c.h.b16 %v2102
    %v2186 = vunpack.c.l.b16 %v2103
    %v2187 = vunpack.c.h.b16 %v2103
    %v2188 = vunpack.c.l.b16 %v2104
    %v2189 = vunpack.c.h.b16 %v2104
    %v2190 = vunpack.c.l.b16 %v2105
    %v2191 = vunpack.c.h.b16 %v2105
    %v2192 = vunpack.c.l.b16 %v2106
    %v2193 = vunpack.c.h.b16 %v2106
    %v2194 = vunpack.c.l.b16 %v2107
    %v2195 = vunpack.c.h.b16 %v2107
    %v2196 = vunpack.c.l.b16 %v2108
    %v2197 = vunpack.c.h.b16 %v2108
    %v2198 = vunpack.c.l.b16 %v2109
    %v2199 = vunpack.c.h.b16 %v2109
    %v2200 = vunpack.c.l.b16 %v2110
    %v2201 = vunpack.c.h.b16 %v2110
    %v2202 = vunpack.c.l.b16 %v2111
    %v2203 = vunpack.c.h.b16 %v2111
    %v2204 = vunpack.c.l.b16 %v2112
    %v2205 = vunpack.c.h.b16 %v2112
    %v2206 = vunpack.c.l.b16 %v2113
    %v2207 = vunpack.c.h.b16 %v2113
    %v2208 = vunpack.c.l.b16 %v2114
    %v2209 = vunpack.c.h.b16 %v2114
    %v2210 = vunpack.c.l.b16 %v2115
    %v2211 = vunpack.c.h.b16 %v2115
    %v2212 = vunpack.c.l.b16 %v2116
    %v2213 = vunpack.c.h.b16 %v2116
    %v2214 = vunpack.c.l.b16 %v2117
    %v2215 = vunpack.c.h.b16 %v2117
    %v2216 = vunpack.c.l.b16 %v2118
    %v2217 = vunpack.c.h.b16 %v2118
    %v2218 = vunpack.c.l.b16 %v2119
    %v2219 = vunpack.c.h.b16 %v2119
    %v2220 = vunpack.c.l.b16 %v2120
    %v2221 = vunpack.c.h.b16 %v2120
    %v2222 = vunpack.c.l.b16 %v2121
    %v2223 = vunpack.c.h.b16 %v2121
    %v2224 = vpack.c.b16 %v2162, %v2160
    %v2225 = vpack.c.b16 %v2163, %v2161
    %v2226 = vpack.c.b16 %v2166, %v2164
    %v2227 = vpack.c.b16 %v2167, %v2165
    %v2228 = vpack.c.b16 %v2170, %v2168
    %v2229 = vpack.c.b16 %v2171, %v2169
    %v2230 = vpack.c.b16 %v2174, %v2172
    %v2231 = vpack.c.b16 %v2175, %v2173
    %v2232 = vpack.c.b16 %v2178, %v2176
    %v2233 = vpack.c.b16 %v2179, %v2177
    %v2234 = vpack.c.b16 %v2182, %v2180
    %v2235 = vpack.c.b16 %v2183, %v2181
    %v2236 = vpack.c.b16 %v2186, %v2184
    %v2237 = vpack.c.b16 %v2187, %v2185
    %v2238 = vpack.c.b16 %v2190, %v2188
    %v2239 = vpack.c.b16 %v2191, %v2189
    %v2240 = vpack.c.b16 %v2194, %v2192
    %v2241 = vpack.c.b16 %v2195, %v2193
    %v2242 = vpack.c.b16 %v2198, %v2196
    %v2243 = vpack.c.b16 %v2199, %v2197
    %v2244 = vpack.c.b16 %v2202, %v2200
    %v2245 = vpack.c.b16 %v2203, %v2201
    %v2246 = vpack.c.b16 %v2206, %v2204
    %v2247 = vpack.c.b16 %v2207, %v2205
    %v2248 = vpack.c.b16 %v2210, %v2208
    %v2249 = vpack.c.b16 %v2211, %v2209
    %v2250 = vpack.c.b16 %v2214, %v2212
    %v2251 = vpack.c.b16 %v2215, %v2213
    %v2252 = vpack.c.b16 %v2218, %v2216
    %v2253 = vpack.c.b16 %v2219, %v2217
    %v2254 = vpack.c.b16 %v2222, %v2220
    %v2255 = vpack.c.b16 %v2223, %v2221
    %2288 = vmatpush.bf16.msra.mxu0 %v2238
    %2289 = vmatpush.bf16.msra.mxu0 %v2236
    %2290 = vmatpush.bf16.msra.mxu0 %v2234
    %2291 = vmatpush.bf16.msra.mxu0 %v2232
    %2292 = vmatpush.bf16.msra.mxu0 %v2230
    %2293 = vmatpush.bf16.msra.mxu0 %v2228
    %2294 = vmatpush.bf16.msra.mxu0 %v2226
    %2295 = vmatpush.bf16.msra.mxu0 %v2224
    %2296 = vmatmul.bf16.gmra.mxu0 %v2088
    %v2297 = vpop.f32.mrf.mxu0
    %v2298 = vadd.f32 %v2124, %v2297
    %v2299 = vpop.f32.mrf.mxu0
    %v2300 = vadd.f32 %v2124, %v2299
    %2301 = vdwg.mxu0
    %2302 = vmatpush.bf16.msra.mxu0 %v2254
    %2303 = vmatpush.bf16.msra.mxu0 %v2252
    %2304 = vmatpush.bf16.msra.mxu0 %v2250
    %2305 = vmatpush.bf16.msra.mxu0 %v2248
    %2306 = vmatpush.bf16.msra.mxu0 %v2246
    %2307 = vmatpush.bf16.msra.mxu0 %v2244
    %2308 = vmatpush.bf16.msra.mxu0 %v2242
    %2309 = vmatpush.bf16.msra.mxu0 %v2240
    %2310 = vmatmul.bf16.gmra.mxu0 %v2089
    %v2311 = vpop.f32.mrf.mxu0
    %v2312 = vadd.f32 %v2298, %v2311
    %v2313 = vpop.f32.mrf.mxu0
    %v2314 = vadd.f32 %v2300, %v2313
    %2315 = vdwg.mxu0
    %2316 = vmatpush.bf16.msra.mxu0 %v2239
    %2317 = vmatpush.bf16.msra.mxu0 %v2237
    %2318 = vmatpush.bf16.msra.mxu0 %v2235
    %2319 = vmatpush.bf16.msra.mxu0 %v2233
    %2320 = vmatpush.bf16.msra.mxu0 %v2231
    %2321 = vmatpush.bf16.msra.mxu0 %v2229
    %2322 = vmatpush.bf16.msra.mxu0 %v2227
    %2323 = vmatpush.bf16.msra.mxu0 %v2225
    %2324 = vmatmul.bf16.gmra.mxu0 %v2088
    %v2325 = vpop.f32.mrf.mxu0
    %v2326 = vadd.f32 %v2125, %v2325
    %v2327 = vpop.f32.mrf.mxu0
    %v2328 = vadd.f32 %v2125, %v2327
    %2329 = vdwg.mxu0
    %2330 = vmatpush.bf16.msra.mxu0 %v2255
    %2331 = vmatpush.bf16.msra.mxu0 %v2253
    %2332 = vmatpush.bf16.msra.mxu0 %v2251
    %2333 = vmatpush.bf16.msra.mxu0 %v2249
    %2334 = vmatpush.bf16.msra.mxu0 %v2247
    %2335 = vmatpush.bf16.msra.mxu0 %v2245
    %2336 = vmatpush.bf16.msra.mxu0 %v2243
    %2337 = vmatpush.bf16.msra.mxu0 %v2241
    %2338 = vmatmul.bf16.gmra.mxu0 %v2089
    %v2339 = vpop.f32.mrf.mxu0
    %v2340 = vadd.f32 %v2326, %v2339
    %v2341 = vpop.f32.mrf.mxu0
    %v2342 = vadd.f32 %v2328, %v2341
    %2343 = vdwg.mxu0
    %v2344 = vpack.c.bf16 %v2340, %v2312
    %v2345 = vpack.c.bf16 %v2342, %v2314
    %v2346 = vunpack.c.l.bf16 %v2344
    %v2347 = vunpack.c.h.bf16 %v2344
    %v2348 = vunpack.c.l.bf16 %v2345
    %v2349 = vunpack.c.h.bf16 %v2345
    %v2350 = vmax.f32 %v2346, 0.0
    %v2351 = vmax.f32 %v2347, 0.0
    %v2352 = vmax.f32 %v2348, 0.0
    %v2353 = vmax.f32 %v2349, 0.0
    %v2354 = vpack.c.bf16 %v2352, %v2350
    %v2355 = vpack.c.bf16 %v2353, %v2351
    %v2356 = vld [vmem:[#allocation10] sm:$0xff]
    %v2357 = vld [vmem:[#allocation10 + $0x8] sm:$0xff]
    %v2358 = vld [vmem:[#allocation10 + $0x10] sm:$0xff]
    %v2359 = vld [vmem:[#allocation10 + $0x18] sm:$0xff]
    %v2360 = vld [vmem:[#allocation10 + $0x20] sm:$0xff]
    %v2361 = vld [vmem:[#allocation10 + $0x28] sm:$0xff]
    %v2362 = vld [vmem:[#allocation10 + $0x30] sm:$0xff]
    %v2363 = vld [vmem:[#allocation10 + $0x38] sm:$0xff]
    %v2364 = vld [vmem:[#allocation10 + $0x40] sm:$0xff]
    %v2365 = vld [vmem:[#allocation10 + $0x48] sm:$0xff]
    %v2366 = vld [vmem:[#allocation10 + $0x50] sm:$0xff]
    %v2367 = vld [vmem:[#allocation10 + $0x58] sm:$0xff]
    %v2368 = vld [vmem:[#allocation10 + $0x60] sm:$0xff]
    %v2369 = vld [vmem:[#allocation10 + $0x68] sm:$0xff]
    %v2370 = vld [vmem:[#allocation10 + $0x70] sm:$0xff]
    %v2371 = vld [vmem:[#allocation10 + $0x78] sm:$0xff]
    %v2372 = vld [vmem:[#allocation10 + $0x80] sm:$0xff]
    %v2373 = vld [vmem:[#allocation10 + $0x88] sm:$0xff]
    %v2374 = vld [vmem:[#allocation10 + $0x90] sm:$0xff]
    %v2375 = vld [vmem:[#allocation10 + $0x98] sm:$0xff]
    %v2376 = vld [vmem:[#allocation10 + $0xa0] sm:$0xff]
    %v2377 = vld [vmem:[#allocation10 + $0xa8] sm:$0xff]
    %v2378 = vld [vmem:[#allocation10 + $0xb0] sm:$0xff]
    %v2379 = vld [vmem:[#allocation10 + $0xb8] sm:$0xff]
    %v2380 = vld [vmem:[#allocation10 + $0xc0] sm:$0xff]
    %v2381 = vld [vmem:[#allocation10 + $0xc8] sm:$0xff]
    %v2382 = vld [vmem:[#allocation10 + $0xd0] sm:$0xff]
    %v2383 = vld [vmem:[#allocation10 + $0xd8] sm:$0xff]
    %v2384 = vld [vmem:[#allocation10 + $0xe0] sm:$0xff]
    %v2385 = vld [vmem:[#allocation10 + $0xe8] sm:$0xff]
    %v2386 = vld [vmem:[#allocation10 + $0xf0] sm:$0xff]
    %v2387 = vld [vmem:[#allocation10 + $0xf8] sm:$0xff]
    %v2388 = vld [vmem:[%s15] sm:$0x3]
    %v2390 = vperm.slane %v2388, 0
    %v2391 = vperm.slane %v2388, 1
    %v2426 = vunpack.c.l.b16 %v2356
    %v2427 = vunpack.c.h.b16 %v2356
    %v2428 = vunpack.c.l.b16 %v2357
    %v2429 = vunpack.c.h.b16 %v2357
    %v2430 = vunpack.c.l.b16 %v2358
    %v2431 = vunpack.c.h.b16 %v2358
    %v2432 = vunpack.c.l.b16 %v2359
    %v2433 = vunpack.c.h.b16 %v2359
    %v2434 = vunpack.c.l.b16 %v2360
    %v2435 = vunpack.c.h.b16 %v2360
    %v2436 = vunpack.c.l.b16 %v2361
    %v2437 = vunpack.c.h.b16 %v2361
    %v2438 = vunpack.c.l.b16 %v2362
    %v2439 = vunpack.c.h.b16 %v2362
    %v2440 = vunpack.c.l.b16 %v2363
    %v2441 = vunpack.c.h.b16 %v2363
    %v2442 = vunpack.c.l.b16 %v2364
    %v2443 = vunpack.c.h.b16 %v2364
    %v2444 = vunpack.c.l.b16 %v2365
    %v2445 = vunpack.c.h.b16 %v2365
    %v2446 = vunpack.c.l.b16 %v2366
    %v2447 = vunpack.c.h.b16 %v2366
    %v2448 = vunpack.c.l.b16 %v2367
    %v2449 = vunpack.c.h.b16 %v2367
    %v2450 = vunpack.c.l.b16 %v2368
    %v2451 = vunpack.c.h.b16 %v2368
    %v2452 = vunpack.c.l.b16 %v2369
    %v2453 = vunpack.c.h.b16 %v2369
    %v2454 = vunpack.c.l.b16 %v2370
    %v2455 = vunpack.c.h.b16 %v2370
    %v2456 = vunpack.c.l.b16 %v2371
    %v2457 = vunpack.c.h.b16 %v2371
    %v2458 = vunpack.c.l.b16 %v2372
    %v2459 = vunpack.c.h.b16 %v2372
    %v2460 = vunpack.c.l.b16 %v2373
    %v2461 = vunpack.c.h.b16 %v2373
    %v2462 = vunpack.c.l.b16 %v2374
    %v2463 = vunpack.c.h.b16 %v2374
    %v2464 = vunpack.c.l.b16 %v2375
    %v2465 = vunpack.c.h.b16 %v2375
    %v2466 = vunpack.c.l.b16 %v2376
    %v2467 = vunpack.c.h.b16 %v2376
    %v2468 = vunpack.c.l.b16 %v2377
    %v2469 = vunpack.c.h.b16 %v2377
    %v2470 = vunpack.c.l.b16 %v2378
    %v2471 = vunpack.c.h.b16 %v2378
    %v2472 = vunpack.c.l.b16 %v2379
    %v2473 = vunpack.c.h.b16 %v2379
    %v2474 = vunpack.c.l.b16 %v2380
    %v2475 = vunpack.c.h.b16 %v2380
    %v2476 = vunpack.c.l.b16 %v2381
    %v2477 = vunpack.c.h.b16 %v2381
    %v2478 = vunpack.c.l.b16 %v2382
    %v2479 = vunpack.c.h.b16 %v2382
    %v2480 = vunpack.c.l.b16 %v2383
    %v2481 = vunpack.c.h.b16 %v2383
    %v2482 = vunpack.c.l.b16 %v2384
    %v2483 = vunpack.c.h.b16 %v2384
    %v2484 = vunpack.c.l.b16 %v2385
    %v2485 = vunpack.c.h.b16 %v2385
    %v2486 = vunpack.c.l.b16 %v2386
    %v2487 = vunpack.c.h.b16 %v2386
    %v2488 = vunpack.c.l.b16 %v2387
    %v2489 = vunpack.c.h.b16 %v2387
    %v2490 = vpack.c.b16 %v2428, %v2426
    %v2491 = vpack.c.b16 %v2429, %v2427
    %v2492 = vpack.c.b16 %v2432, %v2430
    %v2493 = vpack.c.b16 %v2433, %v2431
    %v2494 = vpack.c.b16 %v2436, %v2434
    %v2495 = vpack.c.b16 %v2437, %v2435
    %v2496 = vpack.c.b16 %v2440, %v2438
    %v2497 = vpack.c.b16 %v2441, %v2439
    %v2498 = vpack.c.b16 %v2444, %v2442
    %v2499 = vpack.c.b16 %v2445, %v2443
    %v2500 = vpack.c.b16 %v2448, %v2446
    %v2501 = vpack.c.b16 %v2449, %v2447
    %v2502 = vpack.c.b16 %v2452, %v2450
    %v2503 = vpack.c.b16 %v2453, %v2451
    %v2504 = vpack.c.b16 %v2456, %v2454
    %v2505 = vpack.c.b16 %v2457, %v2455
    %v2506 = vpack.c.b16 %v2460, %v2458
    %v2507 = vpack.c.b16 %v2461, %v2459
    %v2508 = vpack.c.b16 %v2464, %v2462
    %v2509 = vpack.c.b16 %v2465, %v2463
    %v2510 = vpack.c.b16 %v2468, %v2466
    %v2511 = vpack.c.b16 %v2469, %v2467
    %v2512 = vpack.c.b16 %v2472, %v2470
    %v2513 = vpack.c.b16 %v2473, %v2471
    %v2514 = vpack.c.b16 %v2476, %v2474
    %v2515 = vpack.c.b16 %v2477, %v2475
    %v2516 = vpack.c.b16 %v2480, %v2478
    %v2517 = vpack.c.b16 %v2481, %v2479
    %v2518 = vpack.c.b16 %v2484, %v2482
    %v2519 = vpack.c.b16 %v2485, %v2483
    %v2520 = vpack.c.b16 %v2488, %v2486
    %v2521 = vpack.c.b16 %v2489, %v2487
    %2554 = vmatpush.bf16.msra.mxu0 %v2504
    %2555 = vmatpush.bf16.msra.mxu0 %v2502
    %2556 = vmatpush.bf16.msra.mxu0 %v2500
    %2557 = vmatpush.bf16.msra.mxu0 %v2498
    %2558 = vmatpush.bf16.msra.mxu0 %v2496
    %2559 = vmatpush.bf16.msra.mxu0 %v2494
    %2560 = vmatpush.bf16.msra.mxu0 %v2492
    %2561 = vmatpush.bf16.msra.mxu0 %v2490
    %2562 = vmatmul.bf16.gmra.mxu0 %v2354
    %v2563 = vpop.f32.mrf.mxu0
    %v2564 = vadd.f32 %v2390, %v2563
    %v2565 = vpop.f32.mrf.mxu0
    %v2566 = vadd.f32 %v2390, %v2565
    %2567 = vdwg.mxu0
    %2568 = vmatpush.bf16.msra.mxu0 %v2520
    %2569 = vmatpush.bf16.msra.mxu0 %v2518
    %2570 = vmatpush.bf16.msra.mxu0 %v2516
    %2571 = vmatpush.bf16.msra.mxu0 %v2514
    %2572 = vmatpush.bf16.msra.mxu0 %v2512
    %2573 = vmatpush.bf16.msra.mxu0 %v2510
    %2574 = vmatpush.bf16.msra.mxu0 %v2508
    %2575 = vmatpush.bf16.msra.mxu0 %v2506
    %2576 = vmatmul.bf16.gmra.mxu0 %v2355
    %v2577 = vpop.f32.mrf.mxu0
    %v2578 = vadd.f32 %v2564, %v2577
    %v2579 = vpop.f32.mrf.mxu0
    %v2580 = vadd.f32 %v2566, %v2579
    %2581 = vdwg.mxu0
    %2582 = vmatpush.bf16.msra.mxu0 %v2505
    %2583 = vmatpush.bf16.msra.mxu0 %v2503
    %2584 = vmatpush.bf16.msra.mxu0 %v2501
    %2585 = vmatpush.bf16.msra.mxu0 %v2499
    %2586 = vmatpush.bf16.msra.mxu0 %v2497
    %2587 = vmatpush.bf16.msra.mxu0 %v2495
    %2588 = vmatpush.bf16.msra.mxu0 %v2493
    %2589 = vmatpush.bf16.msra.mxu0 %v2491
    %2590 = vmatmul.bf16.gmra.mxu0 %v2354
    %v2591 = vpop.f32.mrf.mxu0
    %v2592 = vadd.f32 %v2391, %v2591
    %v2593 = vpop.f32.mrf.mxu0
    %v2594 = vadd.f32 %v2391, %v2593
    %2595 = vdwg.mxu0
    %2596 = vmatpush.bf16.msra.mxu0 %v2521
    %2597 = vmatpush.bf16.msra.mxu0 %v2519
    %2598 = vmatpush.bf16.msra.mxu0 %v2517
    %2599 = vmatpush.bf16.msra.mxu0 %v2515
    %2600 = vmatpush.bf16.msra.mxu0 %v2513
    %2601 = vmatpush.bf16.msra.mxu0 %v2511
    %2602 = vmatpush.bf16.msra.mxu0 %v2509
    %2603 = vmatpush.bf16.msra.mxu0 %v2507
    %2604 = vmatmul.bf16.gmra.mxu0 %v2355
    %v2605 = vpop.f32.mrf.mxu0
    %v2606 = vadd.f32 %v2592, %v2605
    %v2607 = vpop.f32.mrf.mxu0
    %v2608 = vadd.f32 %v2594, %v2607
    %2609 = vdwg.mxu0
    %v2610 = vpack.c.bf16 %v2606, %v2578
    %v2611 = vpack.c.bf16 %v2608, %v2580
    %v2612 = vunpack.c.l.bf16 %v2610
    %v2613 = vunpack.c.h.bf16 %v2610
    %v2614 = vunpack.c.l.bf16 %v2611
    %v2615 = vunpack.c.h.bf16 %v2611
    %v2616 = vmax.f32 %v2612, 0.0
    %v2617 = vmax.f32 %v2613, 0.0
    %v2618 = vmax.f32 %v2614, 0.0
    %v2619 = vmax.f32 %v2615, 0.0
    %v2620 = vpack.c.bf16 %v2618, %v2616
    %v2621 = vpack.c.bf16 %v2619, %v2617
    %v2622 = vld [vmem:[#allocation11] sm:$0xf]
    %v2623 = vld [vmem:[#allocation11 + $0x4] sm:$0xf]
    %v2624 = vld [vmem:[#allocation11 + $0x8] sm:$0xf]
    %v2625 = vld [vmem:[#allocation11 + $0xc] sm:$0xf]
    %v2626 = vld [vmem:[#allocation11 + $0x10] sm:$0xf]
    %v2627 = vld [vmem:[#allocation11 + $0x14] sm:$0xf]
    %v2628 = vld [vmem:[#allocation11 + $0x18] sm:$0xf]
    %v2629 = vld [vmem:[#allocation11 + $0x1c] sm:$0xf]
    %v2630 = vld [vmem:[#allocation11 + $0x20] sm:$0xf]
    %v2631 = vld [vmem:[#allocation11 + $0x24] sm:$0xf]
    %v2632 = vld [vmem:[#allocation11 + $0x28] sm:$0xf]
    %v2633 = vld [vmem:[#allocation11 + $0x2c] sm:$0xf]
    %v2634 = vld [vmem:[#allocation11 + $0x30] sm:$0xf]
    %v2635 = vld [vmem:[#allocation11 + $0x34] sm:$0xf]
    %v2636 = vld [vmem:[#allocation11 + $0x38] sm:$0xf]
    %v2637 = vld [vmem:[#allocation11 + $0x3c] sm:$0xf]
    %v2638 = vld [vmem:[#allocation11 + $0x40] sm:$0xf]
    %v2639 = vld [vmem:[#allocation11 + $0x44] sm:$0xf]
    %v2640 = vld [vmem:[#allocation11 + $0x48] sm:$0xf]
    %v2641 = vld [vmem:[#allocation11 + $0x4c] sm:$0xf]
    %v2642 = vld [vmem:[#allocation11 + $0x50] sm:$0xf]
    %v2643 = vld [vmem:[#allocation11 + $0x54] sm:$0xf]
    %v2644 = vld [vmem:[#allocation11 + $0x58] sm:$0xf]
    %v2645 = vld [vmem:[#allocation11 + $0x5c] sm:$0xf]
    %v2646 = vld [vmem:[#allocation11 + $0x60] sm:$0xf]
    %v2647 = vld [vmem:[#allocation11 + $0x64] sm:$0xf]
    %v2648 = vld [vmem:[#allocation11 + $0x68] sm:$0xf]
    %v2649 = vld [vmem:[#allocation11 + $0x6c] sm:$0xf]
    %v2650 = vld [vmem:[#allocation11 + $0x70] sm:$0xf]
    %v2651 = vld [vmem:[#allocation11 + $0x74] sm:$0xf]
    %v2652 = vld [vmem:[#allocation11 + $0x78] sm:$0xf]
    %v2653 = vld [vmem:[#allocation11 + $0x7c] sm:$0xf]
    %v2654 = vld [vmem:[%s16] sm:$0x1]
    %v2656 = vperm.slane %v2654, 0
    %v2690 = vunpack.c.l.b16 %v2622
    %v2691 = vunpack.c.l.b16 %v2623
    %v2692 = vunpack.c.l.b16 %v2624
    %v2693 = vunpack.c.l.b16 %v2625
    %v2694 = vunpack.c.l.b16 %v2626
    %v2695 = vunpack.c.l.b16 %v2627
    %v2696 = vunpack.c.l.b16 %v2628
    %v2697 = vunpack.c.l.b16 %v2629
    %v2698 = vunpack.c.l.b16 %v2630
    %v2699 = vunpack.c.l.b16 %v2631
    %v2700 = vunpack.c.l.b16 %v2632
    %v2701 = vunpack.c.l.b16 %v2633
    %v2702 = vunpack.c.l.b16 %v2634
    %v2703 = vunpack.c.l.b16 %v2635
    %v2704 = vunpack.c.l.b16 %v2636
    %v2705 = vunpack.c.l.b16 %v2637
    %v2706 = vunpack.c.l.b16 %v2638
    %v2707 = vunpack.c.l.b16 %v2639
    %v2708 = vunpack.c.l.b16 %v2640
    %v2709 = vunpack.c.l.b16 %v2641
    %v2710 = vunpack.c.l.b16 %v2642
    %v2711 = vunpack.c.l.b16 %v2643
    %v2712 = vunpack.c.l.b16 %v2644
    %v2713 = vunpack.c.l.b16 %v2645
    %v2714 = vunpack.c.l.b16 %v2646
    %v2715 = vunpack.c.l.b16 %v2647
    %v2716 = vunpack.c.l.b16 %v2648
    %v2717 = vunpack.c.l.b16 %v2649
    %v2718 = vunpack.c.l.b16 %v2650
    %v2719 = vunpack.c.l.b16 %v2651
    %v2720 = vunpack.c.l.b16 %v2652
    %v2721 = vunpack.c.l.b16 %v2653
    %v2722 = vpack.c.b16 %v2691, %v2690
    %v2723 = vpack.c.b16 %v2693, %v2692
    %v2724 = vpack.c.b16 %v2695, %v2694
    %v2725 = vpack.c.b16 %v2697, %v2696
    %v2726 = vpack.c.b16 %v2699, %v2698
    %v2727 = vpack.c.b16 %v2701, %v2700
    %v2728 = vpack.c.b16 %v2703, %v2702
    %v2729 = vpack.c.b16 %v2705, %v2704
    %v2730 = vpack.c.b16 %v2707, %v2706
    %v2731 = vpack.c.b16 %v2709, %v2708
    %v2732 = vpack.c.b16 %v2711, %v2710
    %v2733 = vpack.c.b16 %v2713, %v2712
    %v2734 = vpack.c.b16 %v2715, %v2714
    %v2735 = vpack.c.b16 %v2717, %v2716
    %v2736 = vpack.c.b16 %v2719, %v2718
    %v2737 = vpack.c.b16 %v2721, %v2720
    %2754 = vmatpush.bf16.msra.mxu0 %v2729
    %2755 = vmatpush.bf16.msra.mxu0 %v2728
    %2756 = vmatpush.bf16.msra.mxu0 %v2727
    %2757 = vmatpush.bf16.msra.mxu0 %v2726
    %2758 = vmatpush.bf16.msra.mxu0 %v2725
    %2759 = vmatpush.bf16.msra.mxu0 %v2724
    %2760 = vmatpush.bf16.msra.mxu0 %v2723
    %2761 = vmatpush.bf16.msra.mxu0 %v2722
    %2762 = vmatmul.bf16.gmra.mxu0 %v2620
    %v2763 = vpop.f32.mrf.mxu0
    %v2764 = vadd.f32 %v2656, %v2763
    %v2765 = vpop.f32.mrf.mxu0
    %v2766 = vadd.f32 %v2656, %v2765
    %2767 = vdwg.mxu0
    %2768 = vmatpush.bf16.msra.mxu0 %v2737
    %2769 = vmatpush.bf16.msra.mxu0 %v2736
    %2770 = vmatpush.bf16.msra.mxu0 %v2735
    %2771 = vmatpush.bf16.msra.mxu0 %v2734
    %2772 = vmatpush.bf16.msra.mxu0 %v2733
    %2773 = vmatpush.bf16.msra.mxu0 %v2732
    %2774 = vmatpush.bf16.msra.mxu0 %v2731
    %2775 = vmatpush.bf16.msra.mxu0 %v2730
    %2776 = vmatmul.bf16.gmra.mxu0 %v2621
    %v2777 = vpop.f32.mrf.mxu0
    %v2778 = vadd.f32 %v2764, %v2777
    %v2779 = vpop.f32.mrf.mxu0
    %v2780 = vadd.f32 %v2766, %v2779
    %2781 = vdwg.mxu0
    %v2782 = vpack.c.bf16 %v2778, %v2778
    %v2783 = vpack.c.bf16 %v2780, %v2780
    %v2784 = vunpack.c.l.bf16 %v2782
    %v2785 = vunpack.c.l.bf16 %v2783
    %v2786 = vmax.f32 %v2784, 0.0
    %v2787 = vmax.f32 %v2785, 0.0
    %v2788 = vpack.c.bf16 %v2787, %v2786
    %v2789 = vld [vmem:[%s7] sm:$0xf]
    %v2790 = vld [vmem:[%s7 + $0x4] sm:$0xf]
    %v2791 = vld [vmem:[%s7 + $0x8] sm:$0xf]
    %v2792 = vld [vmem:[%s7 + $0xc] sm:$0xf]
    %v2793 = vld [vmem:[%s7 + $0x10] sm:$0xf]
    %v2794 = vld [vmem:[%s7 + $0x14] sm:$0xf]
    %v2795 = vld [vmem:[%s7 + $0x18] sm:$0xf]
    %v2796 = vld [vmem:[%s7 + $0x1c] sm:$0xf]
    %v2797 = vld [vmem:[%s7 + $0x20] sm:$0xf]
    %v2798 = vld [vmem:[%s7 + $0x24] sm:$0xf]
    %v2799 = vld [vmem:[%s7 + $0x28] sm:$0xf]
    %v2800 = vld [vmem:[%s7 + $0x2c] sm:$0xf]
    %v2801 = vld [vmem:[%s7 + $0x30] sm:$0xf]
    %v2802 = vld [vmem:[%s7 + $0x34] sm:$0xf]
    %v2803 = vld [vmem:[%s7 + $0x38] sm:$0xf]
    %v2804 = vld [vmem:[%s7 + $0x3c] sm:$0xf]
    %v2805 = vld [vmem:[%s17] sm:$0x1]
    %v2807 = vperm.slane %v2805, 0
    %v2825 = vunpack.c.l.b16 %v2789
    %v2826 = vunpack.c.l.b16 %v2790
    %v2827 = vunpack.c.l.b16 %v2791
    %v2828 = vunpack.c.l.b16 %v2792
    %v2829 = vunpack.c.l.b16 %v2793
    %v2830 = vunpack.c.l.b16 %v2794
    %v2831 = vunpack.c.l.b16 %v2795
    %v2832 = vunpack.c.l.b16 %v2796
    %v2833 = vunpack.c.l.b16 %v2797
    %v2834 = vunpack.c.l.b16 %v2798
    %v2835 = vunpack.c.l.b16 %v2799
    %v2836 = vunpack.c.l.b16 %v2800
    %v2837 = vunpack.c.l.b16 %v2801
    %v2838 = vunpack.c.l.b16 %v2802
    %v2839 = vunpack.c.l.b16 %v2803
    %v2840 = vunpack.c.l.b16 %v2804
    %v2841 = vpack.c.b16 %v2826, %v2825
    %v2842 = vpack.c.b16 %v2828, %v2827
    %v2843 = vpack.c.b16 %v2830, %v2829
    %v2844 = vpack.c.b16 %v2832, %v2831
    %v2845 = vpack.c.b16 %v2834, %v2833
    %v2846 = vpack.c.b16 %v2836, %v2835
    %v2847 = vpack.c.b16 %v2838, %v2837
    %v2848 = vpack.c.b16 %v2840, %v2839
    %2857 = vmatpush.bf16.msra.mxu0 %v2848
    %2858 = vmatpush.bf16.msra.mxu0 %v2847
    %2859 = vmatpush.bf16.msra.mxu0 %v2846
    %2860 = vmatpush.bf16.msra.mxu0 %v2845
    %2861 = vmatpush.bf16.msra.mxu0 %v2844
    %2862 = vmatpush.bf16.msra.mxu0 %v2843
    %2863 = vmatpush.bf16.msra.mxu0 %v2842
    %2864 = vmatpush.bf16.msra.mxu0 %v2841
    %2865 = vmatmul.bf16.gmra.mxu0 %v2788
    %v2866 = vpop.f32.mrf.mxu0
    %v2867 = vadd.f32 %v2807, %v2866
    %v2868 = vpop.f32.mrf.mxu0
    %v2869 = vadd.f32 %v2807, %v2868
    %2870 = vdwg.mxu0
    %v2871 = vpack.c.bf16 %v2867, %v2867
    %v2872 = vpack.c.bf16 %v2869, %v2869
    %v2873 = vunpack.c.l.bf16 %v2871
    %v2874 = vunpack.c.l.bf16 %v2872
    %v2875 = vmax.f32 %v2873, 0.0
    %v2876 = vmax.f32 %v2874, 0.0
    %v2877 = vpack.c.bf16 %v2875, %v2875
    %v2878 = vpack.c.bf16 %v2876, %v2876
    %v2879 = vunpack.c.l.bf16 %v2877
    %v2880 = vunpack.c.l.bf16 %v2878
    %v2881 = vmin.f32 %v2879, 6.0
    %v2882 = vmin.f32 %v2880, 6.0
    %v2883 = vpack.c.bf16 %v2882, %v2881
    %v2884 = vld [vmem:[#allocation13] sm:$0xf]
    %v2885 = vld [vmem:[#allocation13 + $0x4] sm:$0xf]
    %v2886 = vld [vmem:[#allocation13 + $0x8] sm:$0xf]
    %v2887 = vld [vmem:[#allocation13 + $0xc] sm:$0xf]
    %v2888 = vld [vmem:[#allocation13 + $0x10] sm:$0xf]
    %v2889 = vld [vmem:[#allocation13 + $0x14] sm:$0xf]
    %v2890 = vld [vmem:[#allocation13 + $0x18] sm:$0xf]
    %v2891 = vld [vmem:[#allocation13 + $0x1c] sm:$0xf]
    %v2892 = vld [vmem:[#allocation13 + $0x20] sm:$0xf]
    %v2893 = vld [vmem:[#allocation13 + $0x24] sm:$0xf]
    %v2894 = vld [vmem:[#allocation13 + $0x28] sm:$0xf]
    %v2895 = vld [vmem:[#allocation13 + $0x2c] sm:$0xf]
    %v2896 = vld [vmem:[#allocation13 + $0x30] sm:$0xf]
    %v2897 = vld [vmem:[#allocation13 + $0x34] sm:$0xf]
    %v2898 = vld [vmem:[#allocation13 + $0x38] sm:$0xf]
    %v2899 = vld [vmem:[#allocation13 + $0x3c] sm:$0xf]
    %v2900 = vld [vmem:[%s18] sm:$0x1]
    %v2902 = vperm.slane %v2900, 0
    %v2920 = vunpack.c.l.b16 %v2884
    %v2921 = vunpack.c.l.b16 %v2885
    %v2922 = vunpack.c.l.b16 %v2886
    %v2923 = vunpack.c.l.b16 %v2887
    %v2924 = vunpack.c.l.b16 %v2888
    %v2925 = vunpack.c.l.b16 %v2889
    %v2926 = vunpack.c.l.b16 %v2890
    %v2927 = vunpack.c.l.b16 %v2891
    %v2928 = vunpack.c.l.b16 %v2892
    %v2929 = vunpack.c.l.b16 %v2893
    %v2930 = vunpack.c.l.b16 %v2894
    %v2931 = vunpack.c.l.b16 %v2895
    %v2932 = vunpack.c.l.b16 %v2896
    %v2933 = vunpack.c.l.b16 %v2897
    %v2934 = vunpack.c.l.b16 %v2898
    %v2935 = vunpack.c.l.b16 %v2899
    %v2936 = vpack.c.b16 %v2921, %v2920
    %v2937 = vpack.c.b16 %v2923, %v2922
    %v2938 = vpack.c.b16 %v2925, %v2924
    %v2939 = vpack.c.b16 %v2927, %v2926
    %v2940 = vpack.c.b16 %v2929, %v2928
    %v2941 = vpack.c.b16 %v2931, %v2930
    %v2942 = vpack.c.b16 %v2933, %v2932
    %v2943 = vpack.c.b16 %v2935, %v2934
    %2952 = vmatpush.bf16.msra.mxu0 %v2943
    %2953 = vmatpush.bf16.msra.mxu0 %v2942
    %2954 = vmatpush.bf16.msra.mxu0 %v2941
    %2955 = vmatpush.bf16.msra.mxu0 %v2940
    %2956 = vmatpush.bf16.msra.mxu0 %v2939
    %2957 = vmatpush.bf16.msra.mxu0 %v2938
    %2958 = vmatpush.bf16.msra.mxu0 %v2937
    %2959 = vmatpush.bf16.msra.mxu0 %v2936
    %2960 = vmatmul.bf16.gmra.mxu0 %v2883
    %v2961 = vpop.f32.mrf.mxu0
    %v2962 = vadd.f32 %v2902, %v2961
    %v2963 = vpop.f32.mrf.mxu0
    %v2964 = vadd.f32 %v2902, %v2963
    %2965 = vdwg.mxu0
    %v2966 = vpack.c.bf16 %v2962, %v2962
    %v2967 = vpack.c.bf16 %v2964, %v2964
    %v2968 = vunpack.c.l.bf16 %v2966
    %v2969 = vunpack.c.l.bf16 %v2967
    %v2970 = vmax.f32 %v2968, 0.0
    %v2971 = vmax.f32 %v2969, 0.0
    %v2972 = vpack.c.bf16 %v2970, %v2970
    %v2973 = vpack.c.bf16 %v2971, %v2971
    %v2974 = vunpack.c.l.bf16 %v2972
    %v2975 = vunpack.c.l.bf16 %v2973
    %v2976 = vmin.f32 %v2974, 6.0
    %v2977 = vmin.f32 %v2975, 6.0
    %v2978 = vpack.c.bf16 %v2977, %v2976
    %v2979 = vld [vmem:[#allocation14] sm:$0xf]
    %v2980 = vld [vmem:[#allocation14 + $0x4] sm:$0xf]
    %v2981 = vld [vmem:[#allocation14 + $0x8] sm:$0xf]
    %v2982 = vld [vmem:[#allocation14 + $0xc] sm:$0xf]
    %v2983 = vld [vmem:[#allocation14 + $0x10] sm:$0xf]
    %v2984 = vld [vmem:[#allocation14 + $0x14] sm:$0xf]
    %v2985 = vld [vmem:[#allocation14 + $0x18] sm:$0xf]
    %v2986 = vld [vmem:[#allocation14 + $0x1c] sm:$0xf]
    %v2987 = vld [vmem:[#allocation14 + $0x20] sm:$0xf]
    %v2988 = vld [vmem:[#allocation14 + $0x24] sm:$0xf]
    %v2989 = vld [vmem:[#allocation14 + $0x28] sm:$0xf]
    %v2990 = vld [vmem:[#allocation14 + $0x2c] sm:$0xf]
    %v2991 = vld [vmem:[#allocation14 + $0x30] sm:$0xf]
    %v2992 = vld [vmem:[#allocation14 + $0x34] sm:$0xf]
    %v2993 = vld [vmem:[#allocation14 + $0x38] sm:$0xf]
    %v2994 = vld [vmem:[#allocation14 + $0x3c] sm:$0xf]
    %v2995 = vld [vmem:[%s19] sm:$0x1]
    %v2997 = vperm.slane %v2995, 0
    %v3015 = vunpack.c.l.b16 %v2979
    %v3016 = vunpack.c.l.b16 %v2980
    %v3017 = vunpack.c.l.b16 %v2981
    %v3018 = vunpack.c.l.b16 %v2982
    %v3019 = vunpack.c.l.b16 %v2983
    %v3020 = vunpack.c.l.b16 %v2984
    %v3021 = vunpack.c.l.b16 %v2985
    %v3022 = vunpack.c.l.b16 %v2986
    %v3023 = vunpack.c.l.b16 %v2987
    %v3024 = vunpack.c.l.b16 %v2988
    %v3025 = vunpack.c.l.b16 %v2989
    %v3026 = vunpack.c.l.b16 %v2990
    %v3027 = vunpack.c.l.b16 %v2991
    %v3028 = vunpack.c.l.b16 %v2992
    %v3029 = vunpack.c.l.b16 %v2993
    %v3030 = vunpack.c.l.b16 %v2994
    %v3031 = vpack.c.b16 %v3016, %v3015
    %v3032 = vpack.c.b16 %v3018, %v3017
    %v3033 = vpack.c.b16 %v3020, %v3019
    %v3034 = vpack.c.b16 %v3022, %v3021
    %v3035 = vpack.c.b16 %v3024, %v3023
    %v3036 = vpack.c.b16 %v3026, %v3025
    %v3037 = vpack.c.b16 %v3028, %v3027
    %v3038 = vpack.c.b16 %v3030, %v3029
    %3047 = vmatpush.bf16.msra.mxu0 %v3038
    %3048 = vmatpush.bf16.msra.mxu0 %v3037
    %3049 = vmatpush.bf16.msra.mxu0 %v3036
    %3050 = vmatpush.bf16.msra.mxu0 %v3035
    %3051 = vmatpush.bf16.msra.mxu0 %v3034
    %3052 = vmatpush.bf16.msra.mxu0 %v3033
    %3053 = vmatpush.bf16.msra.mxu0 %v3032
    %3054 = vmatpush.bf16.msra.mxu0 %v3031
    %3055 = vmatmul.bf16.gmra.mxu0 %v2978
    %v3056 = vpop.f32.mrf.mxu0
    %v3057 = vadd.f32 %v2997, %v3056
    %v3058 = vpop.f32.mrf.mxu0
    %v3059 = vadd.f32 %v2997, %v3058
    %3060 = vdwg.mxu0
    %v3061 = vpack.c.bf16 %v3057, %v3057
    %v3062 = vpack.c.bf16 %v3059, %v3059
    %v3063 = vunpack.c.l.bf16 %v3061
    %v3064 = vunpack.c.l.bf16 %v3062
    %v3065 = vmax.f32 %v3063, 0.0
    %v3066 = vmax.f32 %v3064, 0.0
    %v3067 = vpack.c.bf16 %v3065, %v3065
    %v3068 = vpack.c.bf16 %v3066, %v3066
    %v3069 = vunpack.c.l.bf16 %v3067
    %v3070 = vunpack.c.l.bf16 %v3068
    %v3071 = vmin.f32 %v3069, 6.0
    %v3072 = vmin.f32 %v3070, 6.0
    %v3073 = vpack.c.bf16 %v3071, %v3071
    %v3074 = vpack.c.bf16 %v3072, %v3072
    %v3075 = vld [vmem:[#allocation16] sm:$0x1]
    %v3076 = vunpack.c.l.bf16 %v3073
    %v3077 = vunpack.c.l.bf16 %v3074
    %v3079 = vperm.slane %v3075, 0
    %v3081 = vmul.f32 %v3076, %v3079
    %v3082 = vmul.f32 %v3077, %v3079
    %3083 = vadd.xlane.f32.xlu0 %v3081
    %v3084 = vpop.xlane.xlu0 %3083
    %3085 = vadd.xlane.f32.xlu0 %v3082
    %v3086 = vpop.xlane.xlu0 %3085
    %v3087 = vld [vmem:[#allocation2] sm:$0x1]
    %v3089 = vperm.slane %v3087, 0
    %v3091 = vadd.f32 %v3084, %v3089
    %v3092 = vadd.f32 %v3086, %v3089
    %v3093 = vxor.u32 %v3091, 2147483648
    %v3094 = vxor.u32 %v3092, 2147483648
    %v3095 = vmul.f32 %v3093, 1.442695
    %v3096 = vpow.pop %v3095
    %v3097 = vmul.f32 %v3094, 1.442695
    %v3098 = vpow.pop %v3097
    %v3099 = vadd.f32 %v3096, 1.0
    %v3100 = vadd.f32 %v3098, 1.0
    %v3101 = vrcp.pop %v3099
    %v3102 = vmul.f32 %v3099, %v3101
    %v3103 = vsub.f32 1.0, %v3102
    %v3104 = vmul.f32 %v3101, %v3103
    %v3105 = vadd.f32 %v3101, %v3104
    %vm3106 = vweird.f32 %v3099
    %vm3107 = vweird.f32 %v3101
    %vm3108 = vmor %vm3106, %vm3107
    %v3109 = vsel %vm3108, %v3101, %v3105
    %v3110 = vand.u32 2147483647, %v3099
    %vm3111 = vcmp.eq.f32.partialorder %v3110, 8.507059e+37
    %v3112 = vand.u32 %v3099, 2147483648
    %v3113 = vor.u32 1.1754944e-38, %v3112
    %v3114 = vsel %vm3111, %v3113, %v3109
    %v3115 = vmul.f32 1.0, %v3114
    %v3116 = vrcp.pop %v3100
    %v3117 = vmul.f32 %v3100, %v3116
    %v3118 = vsub.f32 1.0, %v3117
    %v3119 = vmul.f32 %v3116, %v3118
    %v3120 = vadd.f32 %v3116, %v3119
    %vm3121 = vweird.f32 %v3100
    %vm3122 = vweird.f32 %v3116
    %vm3123 = vmor %vm3121, %vm3122
    %v3124 = vsel %vm3123, %v3116, %v3120
    %v3125 = vand.u32 2147483647, %v3100
    %vm3126 = vcmp.eq.f32.partialorder %v3125, 8.507059e+37
    %v3127 = vand.u32 %v3100, 2147483648
    %v3128 = vor.u32 1.1754944e-38, %v3127
    %v3129 = vsel %vm3126, %v3128, %v3124
    %v3130 = vmul.f32 1.0, %v3129
    %vm3131 = vcmask 7168
    %3132 = vst.msk [vmem:[%s21] sm:$0xff] %vm3131, %v3115
    %3133 = vst.msk [vmem:[%s21 + $0x8] sm:$0xff] %vm3131, %v3130
    // Predicated region
    $region122: #{pd_forward.1} parent=1 // pred_check
      _
    $region123: #{pd_forward.1} parent=1 // pred_check_branch
      %3135 = sbr.rel (0) target = $region125
    $region124: #{pd_forward.1} parent=1 // pred_region
      _
    $region125: #{pd_forward.1} parent=1 // pred_fallthru
      _
    // Predicated region
    $region126: #{pd_forward.1} parent=1 // pred_check
      _
    $region127: #{pd_forward.1} parent=1 // pred_check_branch
      %3137 = sbr.rel (0) target = $region129
    $region128: #{pd_forward.1} parent=1 // pred_region
      _
    $region129: #{pd_forward.1} parent=1 // pred_fallthru
      _
    %3138 = vsyncpa [#allocation4], 1
    %3139 = vsyncpa [#allocation6], 1
    %3140 = vsyncpa [#allocation9], 1
    %3141 = vsyncpa [#allocation12], 1
    %3142 = vsyncpa [#allocation15], 1

</llo_original>
